<compile_context>
chip_gen: v6e
topology: v6e:2x2x1
jax: 0.10.0
libtpu: 0.0.40
codegen_flags: <defaults>
</compile_context>

<pallas_src>
import math
import jax
import jax.numpy as jnp
from jax.experimental import pallas as pl
from jax.experimental.pallas import tpu as pltpu  # noqa: F401  (TPU backend assumed)

# ----------------------------- tiny BERT config -----------------------------
B, S, H = 2, 8, 32          # batch, seq len, hidden size
NH, HD = 2, 16              # heads, head dim  (NH * HD == H)
F = 64                      # FFN intermediate size
L = 2                       # number of transformer layers
V = 32                      # vocab size
MAXPOS = 16                 # max position embeddings
TYPES = 2                   # token type vocab
C = 3                       # num_labels
LN_EPS = 1e-12              # BERT LayerNorm eps
OUT_W = 128                 # lane-dense packed output width


def _layer_norm(x, g, b):
    mu = jnp.mean(x, axis=-1, keepdims=True)
    var = jnp.mean(jnp.square(x - mu), axis=-1, keepdims=True)
    return (x - mu) * jax.lax.rsqrt(var + LN_EPS) * g + b


def bert_cls_kernel(emb_ref, maskb_ref, egl_ref, egb_ref,
                    wqkv_ref, bqkv_ref,
                    wo_ref, bo_ref, l1g_ref, l1b_ref,
                    w1_ref, b1_ref, w2_ref, b2_ref, l2g_ref, l2b_ref,
                    wc_ref, bc_ref, onehot_ref,
                    out_ref):
    # whole batch in one invocation: flatten to (B*S, H) for all dense layers
    x = emb_ref[...].reshape(B * S, H)                # (B*S, H) f32 summed embeddings
    add_mask = maskb_ref[...]                         # (B, 1, S) additive bias (0 / -1e9)

    # embedding LayerNorm (f32)
    x = _layer_norm(x, egl_ref[...], egb_ref[...])

    scale = 1.0 / math.sqrt(HD)
    for l in range(L):                                # static python loop (L=2)
        xb = x.astype(jnp.bfloat16)

        # fused QKV projection: one (B*S,H) @ (H,3H) MXU matmul
        qkv = jnp.dot(xb, wqkv_ref[l],
                      preferred_element_type=jnp.float32) + bqkv_ref[l]   # (B*S, 3H) f32
        q3 = qkv[:, 0 * H:1 * H].reshape(B, S, H)
        k3 = qkv[:, 1 * H:2 * H].reshape(B, S, H)
        v3 = qkv[:, 2 * H:3 * H].reshape(B, S, H)

        # multi-head self-attention: batched over B per head (3-D einsums lower
        # cleanly on Mosaic), then a single (B*S,H)@(H,H) output projection.
        ctx_parts = []
        for h in range(NH):                           # static (NH=2)
            sl = slice(h * HD, (h + 1) * HD)
            qh = q3[:, :, sl].astype(jnp.bfloat16)
            kh = k3[:, :, sl].astype(jnp.bfloat16)
            vh = v3[:, :, sl].astype(jnp.bfloat16)
            sc = jnp.einsum('bqd,bkd->bqk', qh, kh,
                            preferred_element_type=jnp.float32) * scale
            sc = sc + add_mask                         # (B,1,S) broadcasts over queries
            sc = sc - jnp.max(sc, axis=-1, keepdims=True)
            p = jnp.exp(sc)
            p = p * pl.reciprocal(jnp.sum(p, axis=-1, keepdims=True), approx=True)
            ctx_parts.append(
                jnp.einsum('bqk,bkd->bqd', p.astype(jnp.bfloat16), vh,
                           preferred_element_type=jnp.float32))           # (B,S,HD)
        ctx = jnp.concatenate(ctx_parts, axis=-1).reshape(B * S, H)        # (B*S, H) f32
        attn = jnp.dot(ctx.astype(jnp.bfloat16), wo_ref[l],
                       preferred_element_type=jnp.float32) + bo_ref[l]
        x = _layer_norm(x + attn, l1g_ref[l], l1b_ref[l])                  # post-LN

        # feed-forward (bf16 matmul operands, f32 accumulate + elementwise)
        hdn = jnp.dot(x.astype(jnp.bfloat16), w1_ref[l],
                      preferred_element_type=jnp.float32) + b1_ref[l]
        # TODO(synk): HF BERT default GELU is exact erf; tanh approximation used here.
        hdn = jax.nn.gelu(hdn, approximate=True)
        ffn = jnp.dot(hdn.astype(jnp.bfloat16), w2_ref[l],
                      preferred_element_type=jnp.float32) + b2_ref[l]
        x = _layer_norm(x + ffn, l2g_ref[l], l2b_ref[l])

    # CLS pooling (sequence_output[:, 0]); dropout is identity at inference
    pooled = x.reshape(B, S, H)[:, 0, :]                                   # (B, H) f32

    # classifier head (tiny; keep f32)
    logits = jnp.dot(pooled, wc_ref[...],
                     preferred_element_type=jnp.float32) + bc_ref[...]     # (B, C)

    # per-example cross-entropy (mean over batch done in the wrapper)
    m = jnp.max(logits, axis=-1, keepdims=True)
    e = jnp.exp(logits - m)
    logz = m + jnp.log(jnp.sum(e, axis=-1, keepdims=True))
    logp = logits - logz
    nll = -jnp.sum(onehot_ref[...] * logp, axis=-1, keepdims=True)         # (B, 1)

    # lane-dense packed output: [logits | nll | zero pad] -> one 128-lane store
    pad = jnp.zeros((B, OUT_W - C - 1), jnp.float32)
    out_ref[...] = jnp.concatenate([logits, nll, pad], axis=-1)


def init_params(key):
    std = 0.02
    ks = jax.random.split(key, 12)
    bf = jnp.bfloat16
    p = {}
    p['word_emb'] = jax.random.normal(ks[0], (V, H), jnp.float32) * std
    p['pos_emb'] = jax.random.normal(ks[1], (MAXPOS, H), jnp.float32) * std
    p['type_emb'] = jax.random.normal(ks[2], (TYPES, H), jnp.float32) * std
    p['emb_ln_g'] = jnp.ones((1, H), jnp.float32)
    p['emb_ln_b'] = jnp.zeros((1, H), jnp.float32)
    # encoder matmul weights stored bf16 (MXU-native); biases/LN params f32
    p['wq'] = (jax.random.normal(ks[3], (L, H, H), jnp.float32) * std).astype(bf)
    p['wk'] = (jax.random.normal(ks[4], (L, H, H), jnp.float32) * std).astype(bf)
    p['wv'] = (jax.random.normal(ks[5], (L, H, H), jnp.float32) * std).astype(bf)
    p['wo'] = (jax.random.normal(ks[6], (L, H, H), jnp.float32) * std).astype(bf)
    p['bq'] = jnp.zeros((L, 1, H), jnp.float32)
    p['bk'] = jnp.zeros((L, 1, H), jnp.float32)
    p['bv'] = jnp.zeros((L, 1, H), jnp.float32)
    p['bo'] = jnp.zeros((L, 1, H), jnp.float32)
    p['ln1_g'] = jnp.ones((L, 1, H), jnp.float32)
    p['ln1_b'] = jnp.zeros((L, 1, H), jnp.float32)
    p['w1'] = (jax.random.normal(ks[7], (L, H, F), jnp.float32) * std).astype(bf)
    p['b1'] = jnp.zeros((L, 1, F), jnp.float32)
    p['w2'] = (jax.random.normal(ks[8], (L, F, H), jnp.float32) * std).astype(bf)
    p['b2'] = jnp.zeros((L, 1, H), jnp.float32)
    p['ln2_g'] = jnp.ones((L, 1, H), jnp.float32)
    p['ln2_b'] = jnp.zeros((L, 1, H), jnp.float32)
    # classifier head: weight ~ N(0, 0.02), bias = 0 (matches the PyTorch init)
    p['wc'] = jax.random.normal(ks[9], (H, C), jnp.float32) * std
    p['bc'] = jnp.zeros((1, C), jnp.float32)
    return p


@jax.jit
def forward(params, input_ids, attention_mask, token_type_ids, labels):
    # ---- JAX glue: embedding gathers + additive mask + one-hot labels ----
    pos_ids = jnp.arange(S)[None, :]
    emb = (params['word_emb'][input_ids]
           + params['pos_emb'][pos_ids]
           + params['type_emb'][token_type_ids]).astype(jnp.float32)    # (B, S, H)
    mask_bias = ((1.0 - attention_mask.astype(jnp.float32))
                 * -1e9).reshape(B, 1, S)                               # (B, 1, S)
    onehot = jax.nn.one_hot(labels, C, dtype=jnp.float32)               # (B, C)

    # fused QKV weights / biases (one matmul per layer inside the kernel)
    wqkv = jnp.concatenate([params['wq'], params['wk'], params['wv']], axis=-1)  # (L,H,3H) bf16
    bqkv = jnp.concatenate([params['bq'], params['bk'], params['bv']], axis=-1)  # (L,1,3H) f32

    inputs = [emb, mask_bias, params['emb_ln_g'], params['emb_ln_b'],
              wqkv, bqkv, params['wo'], params['bo'],
              params['ln1_g'], params['ln1_b'], params['w1'], params['b1'],
              params['w2'], params['b2'], params['ln2_g'], params['ln2_b'],
              params['wc'], params['bc'], onehot]

    # No grid: the entire (tiny) batch is processed in one kernel invocation;
    # all inputs fit in VMEM as full-array blocks.
    # TODO(synk): at real ModernBERT sizes, stream weights per-layer (grid over
    # L with per-layer BlockSpecs / Buffered(1)) instead of keeping all layers
    # VMEM-resident, and raise vmem_limit_bytes accordingly.
    packed = pl.pallas_call(
        bert_cls_kernel,
        out_shape=jax.ShapeDtypeStruct((B, OUT_W), jnp.float32),
    )(*inputs)

    logits = packed[:, :C]
    nll = packed[:, C]
    loss = jnp.mean(nll)             # CrossEntropyLoss default 'mean' reduction
    return logits, loss


if __name__ == "__main__":
    key = jax.random.PRNGKey(0)
    pkey, k1, k2 = jax.random.split(key, 3)
    params = init_params(pkey)

    input_ids = jax.random.randint(k1, (B, S), 0, V, dtype=jnp.int32)
    attention_mask = jnp.ones((B, S), jnp.int32).at[1, S - 2:].set(0)
    token_type_ids = jnp.zeros((B, S), jnp.int32)
    labels = jax.random.randint(k2, (B,), 0, C, dtype=jnp.int32)

    logits, loss = forward(params, input_ids, attention_mask, token_type_ids, labels)
    jax.block_until_ready((logits, loss))
    # TODO(synk): hidden_states/attentions tuple outputs of the HF wrapper are
    # not re-exposed; only logits and loss (the classification semantics) are.
    print("KERNEL_OK")
</pallas_src>

<mosaic_0001>
module attributes {stable_mosaic.version = 11 : i64} {
  func.func @bert_cls_kernel(%arg0: memref<2x8x32xf32, #tpu.memory_space<vmem>>, %arg1: memref<2x1x8xf32, #tpu.memory_space<vmem>>, %arg2: memref<1x32xf32, #tpu.memory_space<vmem>>, %arg3: memref<1x32xf32, #tpu.memory_space<vmem>>, %arg4: memref<2x32x96xbf16, #tpu.memory_space<vmem>>, %arg5: memref<2x1x96xf32, #tpu.memory_space<vmem>>, %arg6: memref<2x32x32xbf16, #tpu.memory_space<vmem>>, %arg7: memref<2x1x32xf32, #tpu.memory_space<vmem>>, %arg8: memref<2x1x32xf32, #tpu.memory_space<vmem>>, %arg9: memref<2x1x32xf32, #tpu.memory_space<vmem>>, %arg10: memref<2x32x64xbf16, #tpu.memory_space<vmem>>, %arg11: memref<2x1x64xf32, #tpu.memory_space<vmem>>, %arg12: memref<2x64x32xbf16, #tpu.memory_space<vmem>>, %arg13: memref<2x1x32xf32, #tpu.memory_space<vmem>>, %arg14: memref<2x1x32xf32, #tpu.memory_space<vmem>>, %arg15: memref<2x1x32xf32, #tpu.memory_space<vmem>>, %arg16: memref<32x3xf32, #tpu.memory_space<vmem>>, %arg17: memref<1x3xf32, #tpu.memory_space<vmem>>, %arg18: memref<2x3xf32, #tpu.memory_space<vmem>>, %arg19: memref<2x128xf32, #tpu.memory_space<vmem>>) attributes {dimension_semantics = [], scalar_prefetch = 0 : i64, scratch_operands = 0 : i64, tpu.core_type = #tpu.core_type<tc>} {
    %c0 = arith.constant 0 : index
    %c0_0 = arith.constant 0 : index
    %c0_1 = arith.constant 0 : index
    %0 = vector.load %arg0[%c0, %c0_0, %c0_1] : memref<2x8x32xf32, #tpu.memory_space<vmem>>, vector<2x8x32xf32>
    %1 = vector.shape_cast %0 : vector<2x8x32xf32> to vector<16x32xf32>
    %c0_2 = arith.constant 0 : index
    %c0_3 = arith.constant 0 : index
    %c0_4 = arith.constant 0 : index
    %2 = vector.load %arg1[%c0_2, %c0_3, %c0_4] : memref<2x1x8xf32, #tpu.memory_space<vmem>>, vector<2x1x8xf32>
    %c0_5 = arith.constant 0 : index
    %c0_6 = arith.constant 0 : index
    %3 = vector.load %arg2[%c0_5, %c0_6] : memref<1x32xf32, #tpu.memory_space<vmem>>, vector<1x32xf32>
    %c0_7 = arith.constant 0 : index
    %c0_8 = arith.constant 0 : index
    %4 = vector.load %arg3[%c0_7, %c0_8] : memref<1x32xf32, #tpu.memory_space<vmem>>, vector<1x32xf32>
    %cst = arith.constant dense<0.000000e+00> : vector<16xf32>
    %5 = vector.multi_reduction <add>, %1, %cst [1] : vector<16x32xf32> to vector<16xf32>
    %6 = vector.shape_cast %5 : vector<16xf32> to vector<16x1xf32>
    %cst_9 = arith.constant 3.200000e+01 : f32
    %7 = vector.broadcast %cst_9 : f32 to vector<16x1xf32>
    %8 = arith.divf %6, %7 : vector<16x1xf32>
    %9 = vector.broadcast %8 : vector<16x1xf32> to vector<16x32xf32>
    %10 = arith.subf %1, %9 : vector<16x32xf32>
    %11 = arith.mulf %10, %10 : vector<16x32xf32>
    %cst_10 = arith.constant dense<0.000000e+00> : vector<16xf32>
    %12 = vector.multi_reduction <add>, %11, %cst_10 [1] : vector<16x32xf32> to vector<16xf32>
    %13 = vector.shape_cast %12 : vector<16xf32> to vector<16x1xf32>
    %cst_11 = arith.constant 3.200000e+01 : f32
    %14 = vector.broadcast %cst_11 : f32 to vector<16x1xf32>
    %15 = arith.divf %13, %14 : vector<16x1xf32>
    %16 = vector.broadcast %8 : vector<16x1xf32> to vector<16x32xf32>
    %17 = arith.subf %1, %16 : vector<16x32xf32>
    %cst_12 = arith.constant 9.99999996E-13 : f32
    %18 = vector.broadcast %cst_12 : f32 to vector<16x1xf32>
    %19 = arith.addf %15, %18 : vector<16x1xf32>
    %20 = math.rsqrt %19 : vector<16x1xf32>
    %21 = vector.broadcast %20 : vector<16x1xf32> to vector<16x32xf32>
    %22 = arith.mulf %17, %21 : vector<16x32xf32>
    %23 = vector.broadcast %3 : vector<1x32xf32> to vector<16x32xf32>
    %24 = arith.mulf %22, %23 : vector<16x32xf32>
    %25 = vector.broadcast %4 : vector<1x32xf32> to vector<16x32xf32>
    %26 = arith.addf %24, %25 : vector<16x32xf32>
    %27 = arith.truncf %26 : vector<16x32xf32> to vector<16x32xbf16>
    %c0_13 = arith.constant 0 : index
    %c0_14 = arith.constant 0 : index
    %c0_15 = arith.constant 0 : index
    %28 = vector.load %arg4[%c0_13, %c0_14, %c0_15] : memref<2x32x96xbf16, #tpu.memory_space<vmem>>, vector<1x32x96xbf16>
    %29 = vector.shape_cast %28 : vector<1x32x96xbf16> to vector<32x96xbf16>
    %cst_16 = arith.constant dense<0.000000e+00> : vector<16x96xf32>
    %30 = tpu.matmul %27, %29, %cst_16 {dimension_numbers = #tpu.dot_dimension_numbers<[1], [0], [0], [1], [0, 0, 1, 1], [], []>} : vector<16x32xbf16>, vector<32x96xbf16>, vector<16x96xf32> -> vector<16x96xf32>
    %c0_17 = arith.constant 0 : index
    %c0_18 = arith.constant 0 : index
    %c0_19 = arith.constant 0 : index
    %31 = vector.load %arg5[%c0_17, %c0_18, %c0_19] : memref<2x1x96xf32, #tpu.memory_space<vmem>>, vector<1x1x96xf32>
    %32 = vector.shape_cast %31 : vector<1x1x96xf32> to vector<1x96xf32>
    %33 = vector.broadcast %32 : vector<1x96xf32> to vector<16x96xf32>
    %34 = arith.addf %30, %33 : vector<16x96xf32>
    %35 = vector.extract_strided_slice %34 {offsets = [0, 0], sizes = [16, 32], strides = [1, 1]} : vector<16x96xf32> to vector<16x32xf32>
    %36 = vector.shape_cast %35 : vector<16x32xf32> to vector<2x8x32xf32>
    %37 = vector.extract_strided_slice %34 {offsets = [0, 32], sizes = [16, 32], strides = [1, 1]} : vector<16x96xf32> to vector<16x32xf32>
    %38 = vector.shape_cast %37 : vector<16x32xf32> to vector<2x8x32xf32>
    %39 = vector.extract_strided_slice %34 {offsets = [0, 64], sizes = [16, 32], strides = [1, 1]} : vector<16x96xf32> to vector<16x32xf32>
    %40 = vector.shape_cast %39 : vector<16x32xf32> to vector<2x8x32xf32>
    %41 = vector.extract_strided_slice %36 {offsets = [0, 0, 0], sizes = [2, 8, 16], strides = [1, 1, 1]} : vector<2x8x32xf32> to vector<2x8x16xf32>
    %42 = arith.truncf %41 : vector<2x8x16xf32> to vector<2x8x16xbf16>
    %43 = vector.extract_strided_slice %38 {offsets = [0, 0, 0], sizes = [2, 8, 16], strides = [1, 1, 1]} : vector<2x8x32xf32> to vector<2x8x16xf32>
    %44 = arith.truncf %43 : vector<2x8x16xf32> to vector<2x8x16xbf16>
    %45 = vector.extract_strided_slice %40 {offsets = [0, 0, 0], sizes = [2, 8, 16], strides = [1, 1, 1]} : vector<2x8x32xf32> to vector<2x8x16xf32>
    %46 = arith.truncf %45 : vector<2x8x16xf32> to vector<2x8x16xbf16>
    "tpu.trace_start"() <{level = 10 : i32, message = "bqd,bkd->bqk"}> : () -> ()
    %cst_20 = arith.constant dense<0.000000e+00> : vector<2x8x8xf32>
    %47 = tpu.matmul %42, %44, %cst_20 {dimension_numbers = #tpu.dot_dimension_numbers<[2], [2], [1], [1], [0, 0, 0, 1, 1, 1], [0], [0]>} : vector<2x8x16xbf16>, vector<2x8x16xbf16>, vector<2x8x8xf32> -> vector<2x8x8xf32>
    "tpu.trace_stop"() : () -> ()
    %cst_21 = arith.constant 2.500000e-01 : f32
    %48 = vector.broadcast %cst_21 : f32 to vector<2x8x8xf32>
    %49 = arith.mulf %47, %48 : vector<2x8x8xf32>
    %50 = vector.broadcast %2 : vector<2x1x8xf32> to vector<2x8x8xf32>
    %51 = arith.addf %49, %50 : vector<2x8x8xf32>
    %cst_22 = arith.constant dense<0xFF800000> : vector<2x8xf32>
    %52 = vector.multi_reduction <maximumf>, %51, %cst_22 [2] : vector<2x8x8xf32> to vector<2x8xf32>
    %53 = vector.shape_cast %52 : vector<2x8xf32> to vector<2x8x1xf32>
    %54 = vector.broadcast %53 : vector<2x8x1xf32> to vector<2x8x8xf32>
    %55 = arith.subf %51, %54 : vector<2x8x8xf32>
    %56 = math.exp %55 : vector<2x8x8xf32>
    %cst_23 = arith.constant dense<0.000000e+00> : vector<2x8xf32>
    %57 = vector.multi_reduction <add>, %56, %cst_23 [2] : vector<2x8x8xf32> to vector<2x8xf32>
    %58 = vector.shape_cast %57 : vector<2x8xf32> to vector<2x8x1xf32>
    %59 = tpu.reciprocal %58 {approx = true} : vector<2x8x1xf32> -> vector<2x8x1xf32>
    %60 = vector.broadcast %59 : vector<2x8x1xf32> to vector<2x8x8xf32>
    %61 = arith.mulf %56, %60 : vector<2x8x8xf32>
    %62 = arith.truncf %61 : vector<2x8x8xf32> to vector<2x8x8xbf16>
    "tpu.trace_start"() <{level = 10 : i32, message = "bqk,bkd->bqd"}> : () -> ()
    %cst_24 = arith.constant dense<0.000000e+00> : vector<2x8x16xf32>
    %63 = tpu.matmul %62, %46, %cst_24 {dimension_numbers = #tpu.dot_dimension_numbers<[2], [1], [1], [2], [0, 0, 0, 1, 1, 2], [0], [0]>} : vector<2x8x8xbf16>, vector<2x8x16xbf16>, vector<2x8x16xf32> -> vector<2x8x16xf32>
    "tpu.trace_stop"() : () -> ()
    %64 = vector.extract_strided_slice %36 {offsets = [0, 0, 16], sizes = [2, 8, 16], strides = [1, 1, 1]} : vector<2x8x32xf32> to vector<2x8x16xf32>
    %65 = arith.truncf %64 : vector<2x8x16xf32> to vector<2x8x16xbf16>
    %66 = vector.extract_strided_slice %38 {offsets = [0, 0, 16], sizes = [2, 8, 16], strides = [1, 1, 1]} : vector<2x8x32xf32> to vector<2x8x16xf32>
    %67 = arith.truncf %66 : vector<2x8x16xf32> to vector<2x8x16xbf16>
    %68 = vector.extract_strided_slice %40 {offsets = [0, 0, 16], sizes = [2, 8, 16], strides = [1, 1, 1]} : vector<2x8x32xf32> to vector<2x8x16xf32>
    %69 = arith.truncf %68 : vector<2x8x16xf32> to vector<2x8x16xbf16>
    "tpu.trace_start"() <{level = 10 : i32, message = "bqd,bkd->bqk"}> : () -> ()
    %cst_25 = arith.constant dense<0.000000e+00> : vector<2x8x8xf32>
    %70 = tpu.matmul %65, %67, %cst_25 {dimension_numbers = #tpu.dot_dimension_numbers<[2], [2], [1], [1], [0, 0, 0, 1, 1, 1], [0], [0]>} : vector<2x8x16xbf16>, vector<2x8x16xbf16>, vector<2x8x8xf32> -> vector<2x8x8xf32>
    "tpu.trace_stop"() : () -> ()
    %cst_26 = arith.constant 2.500000e-01 : f32
    %71 = vector.broadcast %cst_26 : f32 to vector<2x8x8xf32>
    %72 = arith.mulf %70, %71 : vector<2x8x8xf32>
    %73 = vector.broadcast %2 : vector<2x1x8xf32> to vector<2x8x8xf32>
    %74 = arith.addf %72, %73 : vector<2x8x8xf32>
    %cst_27 = arith.constant dense<0xFF800000> : vector<2x8xf32>
    %75 = vector.multi_reduction <maximumf>, %74, %cst_27 [2] : vector<2x8x8xf32> to vector<2x8xf32>
    %76 = vector.shape_cast %75 : vector<2x8xf32> to vector<2x8x1xf32>
    %77 = vector.broadcast %76 : vector<2x8x1xf32> to vector<2x8x8xf32>
    %78 = arith.subf %74, %77 : vector<2x8x8xf32>
    %79 = math.exp %78 : vector<2x8x8xf32>
    %cst_28 = arith.constant dense<0.000000e+00> : vector<2x8xf32>
    %80 = vector.multi_reduction <add>, %79, %cst_28 [2] : vector<2x8x8xf32> to vector<2x8xf32>
    %81 = vector.shape_cast %80 : vector<2x8xf32> to vector<2x8x1xf32>
    %82 = tpu.reciprocal %81 {approx = true} : vector<2x8x1xf32> -> vector<2x8x1xf32>
    %83 = vector.broadcast %82 : vector<2x8x1xf32> to vector<2x8x8xf32>
    %84 = arith.mulf %79, %83 : vector<2x8x8xf32>
    %85 = arith.truncf %84 : vector<2x8x8xf32> to vector<2x8x8xbf16>
    "tpu.trace_start"() <{level = 10 : i32, message = "bqk,bkd->bqd"}> : () -> ()
    %cst_29 = arith.constant dense<0.000000e+00> : vector<2x8x16xf32>
    %86 = tpu.matmul %85, %69, %cst_29 {dimension_numbers = #tpu.dot_dimension_numbers<[2], [1], [1], [2], [0, 0, 0, 1, 1, 2], [0], [0]>} : vector<2x8x8xbf16>, vector<2x8x16xbf16>, vector<2x8x16xf32> -> vector<2x8x16xf32>
    "tpu.trace_stop"() : () -> ()
    %87 = tpu.concatenate %63, %86 in 2 : vector<2x8x16xf32>, vector<2x8x16xf32> -> vector<2x8x32xf32>
    %88 = vector.shape_cast %87 : vector<2x8x32xf32> to vector<16x32xf32>
    %89 = arith.truncf %88 : vector<16x32xf32> to vector<16x32xbf16>
    %c0_30 = arith.constant 0 : index
    %c0_31 = arith.constant 0 : index
    %c0_32 = arith.constant 0 : index
    %90 = vector.load %arg6[%c0_30, %c0_31, %c0_32] : memref<2x32x32xbf16, #tpu.memory_space<vmem>>, vector<1x32x32xbf16>
    %91 = vector.shape_cast %90 : vector<1x32x32xbf16> to vector<32x32xbf16>
    %cst_33 = arith.constant dense<0.000000e+00> : vector<16x32xf32>
    %92 = tpu.matmul %89, %91, %cst_33 {dimension_numbers = #tpu.dot_dimension_numbers<[1], [0], [0], [1], [0, 0, 1, 1], [], []>} : vector<16x32xbf16>, vector<32x32xbf16>, vector<16x32xf32> -> vector<16x32xf32>
    %c0_34 = arith.constant 0 : index
    %c0_35 = arith.constant 0 : index
    %c0_36 = arith.constant 0 : index
    %93 = vector.load %arg7[%c0_34, %c0_35, %c0_36] : memref<2x1x32xf32, #tpu.memory_space<vmem>>, vector<1x1x32xf32>
    %94 = vector.shape_cast %93 : vector<1x1x32xf32> to vector<1x32xf32>
    %95 = vector.broadcast %94 : vector<1x32xf32> to vector<16x32xf32>
    %96 = arith.addf %92, %95 : vector<16x32xf32>
    %97 = arith.addf %26, %96 : vector<16x32xf32>
    %c0_37 = arith.constant 0 : index
    %c0_38 = arith.constant 0 : index
    %c0_39 = arith.constant 0 : index
    %98 = vector.load %arg8[%c0_37, %c0_38, %c0_39] : memref<2x1x32xf32, #tpu.memory_space<vmem>>, vector<1x1x32xf32>
    %99 = vector.shape_cast %98 : vector<1x1x32xf32> to vector<1x32xf32>
    %c0_40 = arith.constant 0 : index
    %c0_41 = arith.constant 0 : index
    %c0_42 = arith.constant 0 : index
    %100 = vector.load %arg9[%c0_40, %c0_41, %c0_42] : memref<2x1x32xf32, #tpu.memory_space<vmem>>, vector<1x1x32xf32>
    %101 = vector.shape_cast %100 : vector<1x1x32xf32> to vector<1x32xf32>
    %cst_43 = arith.constant dense<0.000000e+00> : vector<16xf32>
    %102 = vector.multi_reduction <add>, %97, %cst_43 [1] : vector<16x32xf32> to vector<16xf32>
    %103 = vector.shape_cast %102 : vector<16xf32> to vector<16x1xf32>
    %cst_44 = arith.constant 3.200000e+01 : f32
    %104 = vector.broadcast %cst_44 : f32 to vector<16x1xf32>
    %105 = arith.divf %103, %104 : vector<16x1xf32>
    %106 = vector.broadcast %105 : vector<16x1xf32> to vector<16x32xf32>
    %107 = arith.subf %97, %106 : vector<16x32xf32>
    %108 = arith.mulf %107, %107 : vector<16x32xf32>
    %cst_45 = arith.constant dense<0.000000e+00> : vector<16xf32>
    %109 = vector.multi_reduction <add>, %108, %cst_45 [1] : vector<16x32xf32> to vector<16xf32>
    %110 = vector.shape_cast %109 : vector<16xf32> to vector<16x1xf32>
    %cst_46 = arith.constant 3.200000e+01 : f32
    %111 = vector.broadcast %cst_46 : f32 to vector<16x1xf32>
    %112 = arith.divf %110, %111 : vector<16x1xf32>
    %113 = vector.broadcast %105 : vector<16x1xf32> to vector<16x32xf32>
    %114 = arith.subf %97, %113 : vector<16x32xf32>
    %cst_47 = arith.constant 9.99999996E-13 : f32
    %115 = vector.broadcast %cst_47 : f32 to vector<16x1xf32>
    %116 = arith.addf %112, %115 : vector<16x1xf32>
    %117 = math.rsqrt %116 : vector<16x1xf32>
    %118 = vector.broadcast %117 : vector<16x1xf32> to vector<16x32xf32>
    %119 = arith.mulf %114, %118 : vector<16x32xf32>
    %120 = vector.broadcast %99 : vector<1x32xf32> to vector<16x32xf32>
    %121 = arith.mulf %119, %120 : vector<16x32xf32>
    %122 = vector.broadcast %101 : vector<1x32xf32> to vector<16x32xf32>
    %123 = arith.addf %121, %122 : vector<16x32xf32>
    %124 = arith.truncf %123 : vector<16x32xf32> to vector<16x32xbf16>
    %c0_48 = arith.constant 0 : index
    %c0_49 = arith.constant 0 : index
    %c0_50 = arith.constant 0 : index
    %125 = vector.load %arg10[%c0_48, %c0_49, %c0_50] : memref<2x32x64xbf16, #tpu.memory_space<vmem>>, vector<1x32x64xbf16>
    %126 = vector.shape_cast %125 : vector<1x32x64xbf16> to vector<32x64xbf16>
    %cst_51 = arith.constant dense<0.000000e+00> : vector<16x64xf32>
    %127 = tpu.matmul %124, %126, %cst_51 {dimension_numbers = #tpu.dot_dimension_numbers<[1], [0], [0], [1], [0, 0, 1, 1], [], []>} : vector<16x32xbf16>, vector<32x64xbf16>, vector<16x64xf32> -> vector<16x64xf32>
    %c0_52 = arith.constant 0 : index
    %c0_53 = arith.constant 0 : index
    %c0_54 = arith.constant 0 : index
    %128 = vector.load %arg11[%c0_52, %c0_53, %c0_54] : memref<2x1x64xf32, #tpu.memory_space<vmem>>, vector<1x1x64xf32>
    %129 = vector.shape_cast %128 : vector<1x1x64xf32> to vector<1x64xf32>
    %130 = vector.broadcast %129 : vector<1x64xf32> to vector<16x64xf32>
    %131 = arith.addf %127, %130 : vector<16x64xf32>
    %132 = arith.mulf %131, %131 : vector<16x64xf32>
    %133 = arith.mulf %131, %132 : vector<16x64xf32>
    %cst_55 = arith.constant 4.471500e-02 : f32
    %134 = vector.broadcast %cst_55 : f32 to vector<16x64xf32>
    %135 = arith.mulf %134, %133 : vector<16x64xf32>
    %136 = arith.addf %131, %135 : vector<16x64xf32>
    %cst_56 = arith.constant 0.797884583 : f32
    %137 = vector.broadcast %cst_56 : f32 to vector<16x64xf32>
    %138 = arith.mulf %137, %136 : vector<16x64xf32>
    %139 = math.tanh %138 : vector<16x64xf32>
    %cst_57 = arith.constant 1.000000e+00 : f32
    %140 = vector.broadcast %cst_57 : f32 to vector<16x64xf32>
    %141 = arith.addf %140, %139 : vector<16x64xf32>
    %cst_58 = arith.constant 5.000000e-01 : f32
    %142 = vector.broadcast %cst_58 : f32 to vector<16x64xf32>
    %143 = arith.mulf %142, %141 : vector<16x64xf32>
    %144 = arith.mulf %131, %143 : vector<16x64xf32>
    %145 = arith.truncf %144 : vector<16x64xf32> to vector<16x64xbf16>
    %c0_59 = arith.constant 0 : index
    %c0_60 = arith.constant 0 : index
    %c0_61 = arith.constant 0 : index
    %146 = vector.load %arg12[%c0_59, %c0_60, %c0_61] : memref<2x64x32xbf16, #tpu.memory_space<vmem>>, vector<1x64x32xbf16>
    %147 = vector.shape_cast %146 : vector<1x64x32xbf16> to vector<64x32xbf16>
    %cst_62 = arith.constant dense<0.000000e+00> : vector<16x32xf32>
    %148 = tpu.matmul %145, %147, %cst_62 {dimension_numbers = #tpu.dot_dimension_numbers<[1], [0], [0], [1], [0, 0, 1, 1], [], []>} : vector<16x64xbf16>, vector<64x32xbf16>, vector<16x32xf32> -> vector<16x32xf32>
    %c0_63 = arith.constant 0 : index
    %c0_64 = arith.constant 0 : index
    %c0_65 = arith.constant 0 : index
    %149 = vector.load %arg13[%c0_63, %c0_64, %c0_65] : memref<2x1x32xf32, #tpu.memory_space<vmem>>, vector<1x1x32xf32>
    %150 = vector.shape_cast %149 : vector<1x1x32xf32> to vector<1x32xf32>
    %151 = vector.broadcast %150 : vector<1x32xf32> to vector<16x32xf32>
    %152 = arith.addf %148, %151 : vector<16x32xf32>
    %153 = arith.addf %123, %152 : vector<16x32xf32>
    %c0_66 = arith.constant 0 : index
    %c0_67 = arith.constant 0 : index
    %c0_68 = arith.constant 0 : index
    %154 = vector.load %arg14[%c0_66, %c0_67, %c0_68] : memref<2x1x32xf32, #tpu.memory_space<vmem>>, vector<1x1x32xf32>
    %155 = vector.shape_cast %154 : vector<1x1x32xf32> to vector<1x32xf32>
    %c0_69 = arith.constant 0 : index
    %c0_70 = arith.constant 0 : index
    %c0_71 = arith.constant 0 : index
    %156 = vector.load %arg15[%c0_69, %c0_70, %c0_71] : memref<2x1x32xf32, #tpu.memory_space<vmem>>, vector<1x1x32xf32>
    %157 = vector.shape_cast %156 : vector<1x1x32xf32> to vector<1x32xf32>
    %cst_72 = arith.constant dense<0.000000e+00> : vector<16xf32>
    %158 = vector.multi_reduction <add>, %153, %cst_72 [1] : vector<16x32xf32> to vector<16xf32>
    %159 = vector.shape_cast %158 : vector<16xf32> to vector<16x1xf32>
    %cst_73 = arith.constant 3.200000e+01 : f32
    %160 = vector.broadcast %cst_73 : f32 to vector<16x1xf32>
    %161 = arith.divf %159, %160 : vector<16x1xf32>
    %162 = vector.broadcast %161 : vector<16x1xf32> to vector<16x32xf32>
    %163 = arith.subf %153, %162 : vector<16x32xf32>
    %164 = arith.mulf %163, %163 : vector<16x32xf32>
    %cst_74 = arith.constant dense<0.000000e+00> : vector<16xf32>
    %165 = vector.multi_reduction <add>, %164, %cst_74 [1] : vector<16x32xf32> to vector<16xf32>
    %166 = vector.shape_cast %165 : vector<16xf32> to vector<16x1xf32>
    %cst_75 = arith.constant 3.200000e+01 : f32
    %167 = vector.broadcast %cst_75 : f32 to vector<16x1xf32>
    %168 = arith.divf %166, %167 : vector<16x1xf32>
    %169 = vector.broadcast %161 : vector<16x1xf32> to vector<16x32xf32>
    %170 = arith.subf %153, %169 : vector<16x32xf32>
    %cst_76 = arith.constant 9.99999996E-13 : f32
    %171 = vector.broadcast %cst_76 : f32 to vector<16x1xf32>
    %172 = arith.addf %168, %171 : vector<16x1xf32>
    %173 = math.rsqrt %172 : vector<16x1xf32>
    %174 = vector.broadcast %173 : vector<16x1xf32> to vector<16x32xf32>
    %175 = arith.mulf %170, %174 : vector<16x32xf32>
    %176 = vector.broadcast %155 : vector<1x32xf32> to vector<16x32xf32>
    %177 = arith.mulf %175, %176 : vector<16x32xf32>
    %178 = vector.broadcast %157 : vector<1x32xf32> to vector<16x32xf32>
    %179 = arith.addf %177, %178 : vector<16x32xf32>
    %180 = arith.truncf %179 : vector<16x32xf32> to vector<16x32xbf16>
    %c1 = arith.constant 1 : index
    %c0_77 = arith.constant 0 : index
    %c0_78 = arith.constant 0 : index
    %181 = vector.load %arg4[%c1, %c0_77, %c0_78] : memref<2x32x96xbf16, #tpu.memory_space<vmem>>, vector<1x32x96xbf16>
    %182 = vector.shape_cast %181 : vector<1x32x96xbf16> to vector<32x96xbf16>
    %cst_79 = arith.constant dense<0.000000e+00> : vector<16x96xf32>
    %183 = tpu.matmul %180, %182, %cst_79 {dimension_numbers = #tpu.dot_dimension_numbers<[1], [0], [0], [1], [0, 0, 1, 1], [], []>} : vector<16x32xbf16>, vector<32x96xbf16>, vector<16x96xf32> -> vector<16x96xf32>
    %c1_80 = arith.constant 1 : index
    %c0_81 = arith.constant 0 : index
    %c0_82 = arith.constant 0 : index
    %184 = vector.load %arg5[%c1_80, %c0_81, %c0_82] : memref<2x1x96xf32, #tpu.memory_space<vmem>>, vector<1x1x96xf32>
    %185 = vector.shape_cast %184 : vector<1x1x96xf32> to vector<1x96xf32>
    %186 = vector.broadcast %185 : vector<1x96xf32> to vector<16x96xf32>
    %187 = arith.addf %183, %186 : vector<16x96xf32>
    %188 = vector.extract_strided_slice %187 {offsets = [0, 0], sizes = [16, 32], strides = [1, 1]} : vector<16x96xf32> to vector<16x32xf32>
    %189 = vector.shape_cast %188 : vector<16x32xf32> to vector<2x8x32xf32>
    %190 = vector.extract_strided_slice %187 {offsets = [0, 32], sizes = [16, 32], strides = [1, 1]} : vector<16x96xf32> to vector<16x32xf32>
    %191 = vector.shape_cast %190 : vector<16x32xf32> to vector<2x8x32xf32>
    %192 = vector.extract_strided_slice %187 {offsets = [0, 64], sizes = [16, 32], strides = [1, 1]} : vector<16x96xf32> to vector<16x32xf32>
    %193 = vector.shape_cast %192 : vector<16x32xf32> to vector<2x8x32xf32>
    %194 = vector.extract_strided_slice %189 {offsets = [0, 0, 0], sizes = [2, 8, 16], strides = [1, 1, 1]} : vector<2x8x32xf32> to vector<2x8x16xf32>
    %195 = arith.truncf %194 : vector<2x8x16xf32> to vector<2x8x16xbf16>
    %196 = vector.extract_strided_slice %191 {offsets = [0, 0, 0], sizes = [2, 8, 16], strides = [1, 1, 1]} : vector<2x8x32xf32> to vector<2x8x16xf32>
    %197 = arith.truncf %196 : vector<2x8x16xf32> to vector<2x8x16xbf16>
    %198 = vector.extract_strided_slice %193 {offsets = [0, 0, 0], sizes = [2, 8, 16], strides = [1, 1, 1]} : vector<2x8x32xf32> to vector<2x8x16xf32>
    %199 = arith.truncf %198 : vector<2x8x16xf32> to vector<2x8x16xbf16>
    "tpu.trace_start"() <{level = 10 : i32, message = "bqd,bkd->bqk"}> : () -> ()
    %cst_83 = arith.constant dense<0.000000e+00> : vector<2x8x8xf32>
    %200 = tpu.matmul %195, %197, %cst_83 {dimension_numbers = #tpu.dot_dimension_numbers<[2], [2], [1], [1], [0, 0, 0, 1, 1, 1], [0], [0]>} : vector<2x8x16xbf16>, vector<2x8x16xbf16>, vector<2x8x8xf32> -> vector<2x8x8xf32>
    "tpu.trace_stop"() : () -> ()
    %cst_84 = arith.constant 2.500000e-01 : f32
    %201 = vector.broadcast %cst_84 : f32 to vector<2x8x8xf32>
    %202 = arith.mulf %200, %201 : vector<2x8x8xf32>
    %203 = vector.broadcast %2 : vector<2x1x8xf32> to vector<2x8x8xf32>
    %204 = arith.addf %202, %203 : vector<2x8x8xf32>
    %cst_85 = arith.constant dense<0xFF800000> : vector<2x8xf32>
    %205 = vector.multi_reduction <maximumf>, %204, %cst_85 [2] : vector<2x8x8xf32> to vector<2x8xf32>
    %206 = vector.shape_cast %205 : vector<2x8xf32> to vector<2x8x1xf32>
    %207 = vector.broadcast %206 : vector<2x8x1xf32> to vector<2x8x8xf32>
    %208 = arith.subf %204, %207 : vector<2x8x8xf32>
    %209 = math.exp %208 : vector<2x8x8xf32>
    %cst_86 = arith.constant dense<0.000000e+00> : vector<2x8xf32>
    %210 = vector.multi_reduction <add>, %209, %cst_86 [2] : vector<2x8x8xf32> to vector<2x8xf32>
    %211 = vector.shape_cast %210 : vector<2x8xf32> to vector<2x8x1xf32>
    %212 = tpu.reciprocal %211 {approx = true} : vector<2x8x1xf32> -> vector<2x8x1xf32>
    %213 = vector.broadcast %212 : vector<2x8x1xf32> to vector<2x8x8xf32>
    %214 = arith.mulf %209, %213 : vector<2x8x8xf32>
    %215 = arith.truncf %214 : vector<2x8x8xf32> to vector<2x8x8xbf16>
    "tpu.trace_start"() <{level = 10 : i32, message = "bqk,bkd->bqd"}> : () -> ()
    %cst_87 = arith.constant dense<0.000000e+00> : vector<2x8x16xf32>
    %216 = tpu.matmul %215, %199, %cst_87 {dimension_numbers = #tpu.dot_dimension_numbers<[2], [1], [1], [2], [0, 0, 0, 1, 1, 2], [0], [0]>} : vector<2x8x8xbf16>, vector<2x8x16xbf16>, vector<2x8x16xf32> -> vector<2x8x16xf32>
    "tpu.trace_stop"() : () -> ()
    %217 = vector.extract_strided_slice %189 {offsets = [0, 0, 16], sizes = [2, 8, 16], strides = [1, 1, 1]} : vector<2x8x32xf32> to vector<2x8x16xf32>
    %218 = arith.truncf %217 : vector<2x8x16xf32> to vector<2x8x16xbf16>
    %219 = vector.extract_strided_slice %191 {offsets = [0, 0, 16], sizes = [2, 8, 16], strides = [1, 1, 1]} : vector<2x8x32xf32> to vector<2x8x16xf32>
    %220 = arith.truncf %219 : vector<2x8x16xf32> to vector<2x8x16xbf16>
    %221 = vector.extract_strided_slice %193 {offsets = [0, 0, 16], sizes = [2, 8, 16], strides = [1, 1, 1]} : vector<2x8x32xf32> to vector<2x8x16xf32>
    %222 = arith.truncf %221 : vector<2x8x16xf32> to vector<2x8x16xbf16>
    "tpu.trace_start"() <{level = 10 : i32, message = "bqd,bkd->bqk"}> : () -> ()
    %cst_88 = arith.constant dense<0.000000e+00> : vector<2x8x8xf32>
    %223 = tpu.matmul %218, %220, %cst_88 {dimension_numbers = #tpu.dot_dimension_numbers<[2], [2], [1], [1], [0, 0, 0, 1, 1, 1], [0], [0]>} : vector<2x8x16xbf16>, vector<2x8x16xbf16>, vector<2x8x8xf32> -> vector<2x8x8xf32>
    "tpu.trace_stop"() : () -> ()
    %cst_89 = arith.constant 2.500000e-01 : f32
    %224 = vector.broadcast %cst_89 : f32 to vector<2x8x8xf32>
    %225 = arith.mulf %223, %224 : vector<2x8x8xf32>
    %226 = vector.broadcast %2 : vector<2x1x8xf32> to vector<2x8x8xf32>
    %227 = arith.addf %225, %226 : vector<2x8x8xf32>
    %cst_90 = arith.constant dense<0xFF800000> : vector<2x8xf32>
    %228 = vector.multi_reduction <maximumf>, %227, %cst_90 [2] : vector<2x8x8xf32> to vector<2x8xf32>
    %229 = vector.shape_cast %228 : vector<2x8xf32> to vector<2x8x1xf32>
    %230 = vector.broadcast %229 : vector<2x8x1xf32> to vector<2x8x8xf32>
    %231 = arith.subf %227, %230 : vector<2x8x8xf32>
    %232 = math.exp %231 : vector<2x8x8xf32>
    %cst_91 = arith.constant dense<0.000000e+00> : vector<2x8xf32>
    %233 = vector.multi_reduction <add>, %232, %cst_91 [2] : vector<2x8x8xf32> to vector<2x8xf32>
    %234 = vector.shape_cast %233 : vector<2x8xf32> to vector<2x8x1xf32>
    %235 = tpu.reciprocal %234 {approx = true} : vector<2x8x1xf32> -> vector<2x8x1xf32>
    %236 = vector.broadcast %235 : vector<2x8x1xf32> to vector<2x8x8xf32>
    %237 = arith.mulf %232, %236 : vector<2x8x8xf32>
    %238 = arith.truncf %237 : vector<2x8x8xf32> to vector<2x8x8xbf16>
    "tpu.trace_start"() <{level = 10 : i32, message = "bqk,bkd->bqd"}> : () -> ()
    %cst_92 = arith.constant dense<0.000000e+00> : vector<2x8x16xf32>
    %239 = tpu.matmul %238, %222, %cst_92 {dimension_numbers = #tpu.dot_dimension_numbers<[2], [1], [1], [2], [0, 0, 0, 1, 1, 2], [0], [0]>} : vector<2x8x8xbf16>, vector<2x8x16xbf16>, vector<2x8x16xf32> -> vector<2x8x16xf32>
    "tpu.trace_stop"() : () -> ()
    %240 = tpu.concatenate %216, %239 in 2 : vector<2x8x16xf32>, vector<2x8x16xf32> -> vector<2x8x32xf32>
    %241 = vector.shape_cast %240 : vector<2x8x32xf32> to vector<16x32xf32>
    %242 = arith.truncf %241 : vector<16x32xf32> to vector<16x32xbf16>
    %c1_93 = arith.constant 1 : index
    %c0_94 = arith.constant 0 : index
    %c0_95 = arith.constant 0 : index
    %243 = vector.load %arg6[%c1_93, %c0_94, %c0_95] : memref<2x32x32xbf16, #tpu.memory_space<vmem>>, vector<1x32x32xbf16>
    %244 = vector.shape_cast %243 : vector<1x32x32xbf16> to vector<32x32xbf16>
    %cst_96 = arith.constant dense<0.000000e+00> : vector<16x32xf32>
    %245 = tpu.matmul %242, %244, %cst_96 {dimension_numbers = #tpu.dot_dimension_numbers<[1], [0], [0], [1], [0, 0, 1, 1], [], []>} : vector<16x32xbf16>, vector<32x32xbf16>, vector<16x32xf32> -> vector<16x32xf32>
    %c1_97 = arith.constant 1 : index
    %c0_98 = arith.constant 0 : index
    %c0_99 = arith.constant 0 : index
    %246 = vector.load %arg7[%c1_97, %c0_98, %c0_99] : memref<2x1x32xf32, #tpu.memory_space<vmem>>, vector<1x1x32xf32>
    %247 = vector.shape_cast %246 : vector<1x1x32xf32> to vector<1x32xf32>
    %248 = vector.broadcast %247 : vector<1x32xf32> to vector<16x32xf32>
    %249 = arith.addf %245, %248 : vector<16x32xf32>
    %250 = arith.addf %179, %249 : vector<16x32xf32>
    %c1_100 = arith.constant 1 : index
    %c0_101 = arith.constant 0 : index
    %c0_102 = arith.constant 0 : index
    %251 = vector.load %arg8[%c1_100, %c0_101, %c0_102] : memref<2x1x32xf32, #tpu.memory_space<vmem>>, vector<1x1x32xf32>
    %252 = vector.shape_cast %251 : vector<1x1x32xf32> to vector<1x32xf32>
    %c1_103 = arith.constant 1 : index
    %c0_104 = arith.constant 0 : index
    %c0_105 = arith.constant 0 : index
    %253 = vector.load %arg9[%c1_103, %c0_104, %c0_105] : memref<2x1x32xf32, #tpu.memory_space<vmem>>, vector<1x1x32xf32>
    %254 = vector.shape_cast %253 : vector<1x1x32xf32> to vector<1x32xf32>
    %cst_106 = arith.constant dense<0.000000e+00> : vector<16xf32>
    %255 = vector.multi_reduction <add>, %250, %cst_106 [1] : vector<16x32xf32> to vector<16xf32>
    %256 = vector.shape_cast %255 : vector<16xf32> to vector<16x1xf32>
    %cst_107 = arith.constant 3.200000e+01 : f32
    %257 = vector.broadcast %cst_107 : f32 to vector<16x1xf32>
    %258 = arith.divf %256, %257 : vector<16x1xf32>
    %259 = vector.broadcast %258 : vector<16x1xf32> to vector<16x32xf32>
    %260 = arith.subf %250, %259 : vector<16x32xf32>
    %261 = arith.mulf %260, %260 : vector<16x32xf32>
    %cst_108 = arith.constant dense<0.000000e+00> : vector<16xf32>
    %262 = vector.multi_reduction <add>, %261, %cst_108 [1] : vector<16x32xf32> to vector<16xf32>
    %263 = vector.shape_cast %262 : vector<16xf32> to vector<16x1xf32>
    %cst_109 = arith.constant 3.200000e+01 : f32
    %264 = vector.broadcast %cst_109 : f32 to vector<16x1xf32>
    %265 = arith.divf %263, %264 : vector<16x1xf32>
    %266 = vector.broadcast %258 : vector<16x1xf32> to vector<16x32xf32>
    %267 = arith.subf %250, %266 : vector<16x32xf32>
    %cst_110 = arith.constant 9.99999996E-13 : f32
    %268 = vector.broadcast %cst_110 : f32 to vector<16x1xf32>
    %269 = arith.addf %265, %268 : vector<16x1xf32>
    %270 = math.rsqrt %269 : vector<16x1xf32>
    %271 = vector.broadcast %270 : vector<16x1xf32> to vector<16x32xf32>
    %272 = arith.mulf %267, %271 : vector<16x32xf32>
    %273 = vector.broadcast %252 : vector<1x32xf32> to vector<16x32xf32>
    %274 = arith.mulf %272, %273 : vector<16x32xf32>
    %275 = vector.broadcast %254 : vector<1x32xf32> to vector<16x32xf32>
    %276 = arith.addf %274, %275 : vector<16x32xf32>
    %277 = arith.truncf %276 : vector<16x32xf32> to vector<16x32xbf16>
    %c1_111 = arith.constant 1 : index
    %c0_112 = arith.constant 0 : index
    %c0_113 = arith.constant 0 : index
    %278 = vector.load %arg10[%c1_111, %c0_112, %c0_113] : memref<2x32x64xbf16, #tpu.memory_space<vmem>>, vector<1x32x64xbf16>
    %279 = vector.shape_cast %278 : vector<1x32x64xbf16> to vector<32x64xbf16>
    %cst_114 = arith.constant dense<0.000000e+00> : vector<16x64xf32>
    %280 = tpu.matmul %277, %279, %cst_114 {dimension_numbers = #tpu.dot_dimension_numbers<[1], [0], [0], [1], [0, 0, 1, 1], [], []>} : vector<16x32xbf16>, vector<32x64xbf16>, vector<16x64xf32> -> vector<16x64xf32>
    %c1_115 = arith.constant 1 : index
    %c0_116 = arith.constant 0 : index
    %c0_117 = arith.constant 0 : index
    %281 = vector.load %arg11[%c1_115, %c0_116, %c0_117] : memref<2x1x64xf32, #tpu.memory_space<vmem>>, vector<1x1x64xf32>
    %282 = vector.shape_cast %281 : vector<1x1x64xf32> to vector<1x64xf32>
    %283 = vector.broadcast %282 : vector<1x64xf32> to vector<16x64xf32>
    %284 = arith.addf %280, %283 : vector<16x64xf32>
    %285 = arith.mulf %284, %284 : vector<16x64xf32>
    %286 = arith.mulf %284, %285 : vector<16x64xf32>
    %cst_118 = arith.constant 4.471500e-02 : f32
    %287 = vector.broadcast %cst_118 : f32 to vector<16x64xf32>
    %288 = arith.mulf %287, %286 : vector<16x64xf32>
    %289 = arith.addf %284, %288 : vector<16x64xf32>
    %cst_119 = arith.constant 0.797884583 : f32
    %290 = vector.broadcast %cst_119 : f32 to vector<16x64xf32>
    %291 = arith.mulf %290, %289 : vector<16x64xf32>
    %292 = math.tanh %291 : vector<16x64xf32>
    %cst_120 = arith.constant 1.000000e+00 : f32
    %293 = vector.broadcast %cst_120 : f32 to vector<16x64xf32>
    %294 = arith.addf %293, %292 : vector<16x64xf32>
    %cst_121 = arith.constant 5.000000e-01 : f32
    %295 = vector.broadcast %cst_121 : f32 to vector<16x64xf32>
    %296 = arith.mulf %295, %294 : vector<16x64xf32>
    %297 = arith.mulf %284, %296 : vector<16x64xf32>
    %298 = arith.truncf %297 : vector<16x64xf32> to vector<16x64xbf16>
    %c1_122 = arith.constant 1 : index
    %c0_123 = arith.constant 0 : index
    %c0_124 = arith.constant 0 : index
    %299 = vector.load %arg12[%c1_122, %c0_123, %c0_124] : memref<2x64x32xbf16, #tpu.memory_space<vmem>>, vector<1x64x32xbf16>
    %300 = vector.shape_cast %299 : vector<1x64x32xbf16> to vector<64x32xbf16>
    %cst_125 = arith.constant dense<0.000000e+00> : vector<16x32xf32>
    %301 = tpu.matmul %298, %300, %cst_125 {dimension_numbers = #tpu.dot_dimension_numbers<[1], [0], [0], [1], [0, 0, 1, 1], [], []>} : vector<16x64xbf16>, vector<64x32xbf16>, vector<16x32xf32> -> vector<16x32xf32>
    %c1_126 = arith.constant 1 : index
    %c0_127 = arith.constant 0 : index
    %c0_128 = arith.constant 0 : index
    %302 = vector.load %arg13[%c1_126, %c0_127, %c0_128] : memref<2x1x32xf32, #tpu.memory_space<vmem>>, vector<1x1x32xf32>
    %303 = vector.shape_cast %302 : vector<1x1x32xf32> to vector<1x32xf32>
    %304 = vector.broadcast %303 : vector<1x32xf32> to vector<16x32xf32>
    %305 = arith.addf %301, %304 : vector<16x32xf32>
    %306 = arith.addf %276, %305 : vector<16x32xf32>
    %c1_129 = arith.constant 1 : index
    %c0_130 = arith.constant 0 : index
    %c0_131 = arith.constant 0 : index
    %307 = vector.load %arg14[%c1_129, %c0_130, %c0_131] : memref<2x1x32xf32, #tpu.memory_space<vmem>>, vector<1x1x32xf32>
    %308 = vector.shape_cast %307 : vector<1x1x32xf32> to vector<1x32xf32>
    %c1_132 = arith.constant 1 : index
    %c0_133 = arith.constant 0 : index
    %c0_134 = arith.constant 0 : index
    %309 = vector.load %arg15[%c1_132, %c0_133, %c0_134] : memref<2x1x32xf32, #tpu.memory_space<vmem>>, vector<1x1x32xf32>
    %310 = vector.shape_cast %309 : vector<1x1x32xf32> to vector<1x32xf32>
    %cst_135 = arith.constant dense<0.000000e+00> : vector<16xf32>
    %311 = vector.multi_reduction <add>, %306, %cst_135 [1] : vector<16x32xf32> to vector<16xf32>
    %312 = vector.shape_cast %311 : vector<16xf32> to vector<16x1xf32>
    %cst_136 = arith.constant 3.200000e+01 : f32
    %313 = vector.broadcast %cst_136 : f32 to vector<16x1xf32>
    %314 = arith.divf %312, %313 : vector<16x1xf32>
    %315 = vector.broadcast %314 : vector<16x1xf32> to vector<16x32xf32>
    %316 = arith.subf %306, %315 : vector<16x32xf32>
    %317 = arith.mulf %316, %316 : vector<16x32xf32>
    %cst_137 = arith.constant dense<0.000000e+00> : vector<16xf32>
    %318 = vector.multi_reduction <add>, %317, %cst_137 [1] : vector<16x32xf32> to vector<16xf32>
    %319 = vector.shape_cast %318 : vector<16xf32> to vector<16x1xf32>
    %cst_138 = arith.constant 3.200000e+01 : f32
    %320 = vector.broadcast %cst_138 : f32 to vector<16x1xf32>
    %321 = arith.divf %319, %320 : vector<16x1xf32>
    %322 = vector.broadcast %314 : vector<16x1xf32> to vector<16x32xf32>
    %323 = arith.subf %306, %322 : vector<16x32xf32>
    %cst_139 = arith.constant 9.99999996E-13 : f32
    %324 = vector.broadcast %cst_139 : f32 to vector<16x1xf32>
    %325 = arith.addf %321, %324 : vector<16x1xf32>
    %326 = math.rsqrt %325 : vector<16x1xf32>
    %327 = vector.broadcast %326 : vector<16x1xf32> to vector<16x32xf32>
    %328 = arith.mulf %323, %327 : vector<16x32xf32>
    %329 = vector.broadcast %308 : vector<1x32xf32> to vector<16x32xf32>
    %330 = arith.mulf %328, %329 : vector<16x32xf32>
    %331 = vector.broadcast %310 : vector<1x32xf32> to vector<16x32xf32>
    %332 = arith.addf %330, %331 : vector<16x32xf32>
    %333 = vector.shape_cast %332 : vector<16x32xf32> to vector<2x8x32xf32>
    %334 = vector.extract_strided_slice %333 {offsets = [0, 0, 0], sizes = [2, 1, 32], strides = [1, 1, 1]} : vector<2x8x32xf32> to vector<2x1x32xf32>
    %335 = vector.shape_cast %334 : vector<2x1x32xf32> to vector<2x32xf32>
    %c0_140 = arith.constant 0 : index
    %c0_141 = arith.constant 0 : index
    %336 = vector.load %arg16[%c0_140, %c0_141] : memref<32x3xf32, #tpu.memory_space<vmem>>, vector<32x3xf32>
    %cst_142 = arith.constant dense<0.000000e+00> : vector<2x3xf32>
    %337 = tpu.matmul %335, %336, %cst_142 {dimension_numbers = #tpu.dot_dimension_numbers<[1], [0], [0], [1], [0, 0, 1, 1], [], []>} : vector<2x32xf32>, vector<32x3xf32>, vector<2x3xf32> -> vector<2x3xf32>
    %c0_143 = arith.constant 0 : index
    %c0_144 = arith.constant 0 : index
    %338 = vector.load %arg17[%c0_143, %c0_144] : memref<1x3xf32, #tpu.memory_space<vmem>>, vector<1x3xf32>
    %339 = vector.broadcast %338 : vector<1x3xf32> to vector<2x3xf32>
    %340 = arith.addf %337, %339 : vector<2x3xf32>
    %cst_145 = arith.constant dense<0xFF800000> : vector<2xf32>
    %341 = vector.multi_reduction <maximumf>, %340, %cst_145 [1] : vector<2x3xf32> to vector<2xf32>
    %342 = vector.shape_cast %341 : vector<2xf32> to vector<2x1xf32>
    %343 = vector.broadcast %342 : vector<2x1xf32> to vector<2x3xf32>
    %344 = arith.subf %340, %343 : vector<2x3xf32>
    %345 = math.exp %344 : vector<2x3xf32>
    %cst_146 = arith.constant dense<0.000000e+00> : vector<2xf32>
    %346 = vector.multi_reduction <add>, %345, %cst_146 [1] : vector<2x3xf32> to vector<2xf32>
    %347 = vector.shape_cast %346 : vector<2xf32> to vector<2x1xf32>
    %348 = math.log %347 : vector<2x1xf32>
    %349 = arith.addf %342, %348 : vector<2x1xf32>
    %350 = vector.broadcast %349 : vector<2x1xf32> to vector<2x3xf32>
    %351 = arith.subf %340, %350 : vector<2x3xf32>
    %c0_147 = arith.constant 0 : index
    %c0_148 = arith.constant 0 : index
    %352 = vector.load %arg18[%c0_147, %c0_148] : memref<2x3xf32, #tpu.memory_space<vmem>>, vector<2x3xf32>
    %353 = arith.mulf %352, %351 : vector<2x3xf32>
    %cst_149 = arith.constant dense<0.000000e+00> : vector<2xf32>
    %354 = vector.multi_reduction <add>, %353, %cst_149 [1] : vector<2x3xf32> to vector<2xf32>
    %355 = vector.shape_cast %354 : vector<2xf32> to vector<2x1xf32>
    %cst_150 = arith.constant 0.000000e+00 : f32
    %356 = vector.broadcast %cst_150 : f32 to vector<2x1xf32>
    %357 = arith.subf %356, %355 : vector<2x1xf32>
    %cst_151 = arith.constant 0.000000e+00 : f32
    %358 = vector.broadcast %cst_151 : f32 to vector<2x124xf32>
    %359 = tpu.concatenate %340, %357, %358 in 1 : vector<2x3xf32>, vector<2x1xf32>, vector<2x124xf32> -> vector<2x128xf32>
    %c0_152 = arith.constant 0 : index
    %c0_153 = arith.constant 0 : index
    %360 = vector.load %arg19[%c0_152, %c0_153] : memref<2x128xf32, #tpu.memory_space<vmem>>, vector<2x128xf32>
    tpu.vector_store %arg19[%c0_152, %c0_153], %359 {strides = array<i32>} : memref<2x128xf32, #tpu.memory_space<vmem>>, vector<2x128xf32>,
    return
  }
}

</mosaic_0001>

<llo_original>
// kernel: forward.1
$region0: #{forward.1}
  #allocation0 [shape = 'u32[]', space=smem, size = 0x4, offset = 0x4, fixed_abs, tag = 'smem constant byte address 0x4 - core index']
  #allocation1 [shape = 'u32[144,128]{1,0:T(1,128)}', space=vmem, size = 0x12000, scoped, tag = 'internal scratch']
  %s0 = inlined_call_operand.vmem [shape: f32[2,8,32], index: 0, kind: input, shape index: {}]
  %s1 = inlined_call_operand.vmem [shape: f32[2,1,8], index: 1, kind: input, shape index: {}]
  %s2 = inlined_call_operand.vmem [shape: f32[1,32], index: 2, kind: input, shape index: {}]
  %s3 = inlined_call_operand.vmem [shape: f32[1,32], index: 3, kind: input, shape index: {}]
  %s4 = inlined_call_operand.vmem [shape: bf16[2,32,96], index: 4, kind: input, shape index: {}]
  %s5 = inlined_call_operand.vmem [shape: f32[2,1,96], index: 5, kind: input, shape index: {}]
  %s6 = inlined_call_operand.vmem [shape: bf16[2,32,32], index: 6, kind: input, shape index: {}]
  %s7 = inlined_call_operand.vmem [shape: f32[2,1,32], index: 7, kind: input, shape index: {}]
  %s8 = inlined_call_operand.vmem [shape: f32[2,1,32], index: 8, kind: input, shape index: {}]
  %s9 = inlined_call_operand.vmem [shape: f32[2,1,32], index: 9, kind: input, shape index: {}]
  %s10 = inlined_call_operand.vmem [shape: bf16[2,32,64], index: 10, kind: input, shape index: {}]
  %s11 = inlined_call_operand.vmem [shape: f32[2,1,64], index: 11, kind: input, shape index: {}]
  %s12 = inlined_call_operand.vmem [shape: bf16[2,64,32], index: 12, kind: input, shape index: {}]
  %s13 = inlined_call_operand.vmem [shape: f32[2,1,32], index: 13, kind: input, shape index: {}]
  %s14 = inlined_call_operand.vmem [shape: f32[2,1,32], index: 14, kind: input, shape index: {}]
  %s15 = inlined_call_operand.vmem [shape: f32[2,1,32], index: 15, kind: input, shape index: {}]
  %s16 = inlined_call_operand.vmem [shape: f32[32,3], index: 16, kind: input, shape index: {}]
  %s17 = inlined_call_operand.vmem [shape: f32[1,3], index: 17, kind: input, shape index: {}]
  %s18 = inlined_call_operand.vmem [shape: f32[2,3], index: 18, kind: input, shape index: {}]
  %s19 = inlined_call_operand.vmem [shape: f32[2,128], index: 19, kind: output, shape index: {}]
  %s20 = sld [smem:[#allocation0]]
  $region86: #{forward.1} parent=0
    _
  %s22 = ssub.s32 1, %s20
  %s23 = scalar_select 0, %s22, %s20
  // Predicated region
  $region2: #{forward.1} parent=0 // pred_check
    _
  $region3: #{forward.1} parent=0 // pred_check_branch
    %25 = sbr.rel (0) target = $region5
  $region4: #{forward.1} parent=0 // pred_region
    _
  $region5: #{forward.1} parent=0 // pred_fallthru
    _
  // Predicated region
  $region6: #{forward.1} parent=0 // pred_check
    _
  $region7: #{forward.1} parent=0 // pred_check_branch
    %27 = sbr.rel (0) target = $region9
  $region8: #{forward.1} parent=0 // pred_region
    _
  $region9: #{forward.1} parent=0 // pred_fallthru
    _
  // Predicated region
  $region10: #{forward.1} parent=0 // pred_check
    _
  $region11: #{forward.1} parent=0 // pred_check_branch
    %29 = sbr.rel (0) target = $region13
  $region12: #{forward.1} parent=0 // pred_region
    _
  $region13: #{forward.1} parent=0 // pred_fallthru
    _
  // Predicated region
  $region14: #{forward.1} parent=0 // pred_check
    _
  $region15: #{forward.1} parent=0 // pred_check_branch
    %31 = sbr.rel (0) target = $region17
  $region16: #{forward.1} parent=0 // pred_region
    _
  $region17: #{forward.1} parent=0 // pred_fallthru
    _
  // Predicated region
  $region18: #{forward.1} parent=0 // pred_check
    _
  $region19: #{forward.1} parent=0 // pred_check_branch
    %33 = sbr.rel (0) target = $region21
  $region20: #{forward.1} parent=0 // pred_region
    _
  $region21: #{forward.1} parent=0 // pred_fallthru
    _
  // Predicated region
  $region22: #{forward.1} parent=0 // pred_check
    _
  $region23: #{forward.1} parent=0 // pred_check_branch
    %35 = sbr.rel (0) target = $region25
  $region24: #{forward.1} parent=0 // pred_region
    _
  $region25: #{forward.1} parent=0 // pred_fallthru
    _
  // Predicated region
  $region26: #{forward.1} parent=0 // pred_check
    _
  $region27: #{forward.1} parent=0 // pred_check_branch
    %37 = sbr.rel (0) target = $region29
  $region28: #{forward.1} parent=0 // pred_region
    _
  $region29: #{forward.1} parent=0 // pred_fallthru
    _
  // Predicated region
  $region30: #{forward.1} parent=0 // pred_check
    _
  $region31: #{forward.1} parent=0 // pred_check_branch
    %39 = sbr.rel (0) target = $region33
  $region32: #{forward.1} parent=0 // pred_region
    _
  $region33: #{forward.1} parent=0 // pred_fallthru
    _
  // Predicated region
  $region34: #{forward.1} parent=0 // pred_check
    _
  $region35: #{forward.1} parent=0 // pred_check_branch
    %41 = sbr.rel (0) target = $region37
  $region36: #{forward.1} parent=0 // pred_region
    _
  $region37: #{forward.1} parent=0 // pred_fallthru
    _
  // Predicated region
  $region38: #{forward.1} parent=0 // pred_check
    _
  $region39: #{forward.1} parent=0 // pred_check_branch
    %43 = sbr.rel (0) target = $region41
  $region40: #{forward.1} parent=0 // pred_region
    _
  $region41: #{forward.1} parent=0 // pred_fallthru
    _
  // Predicated region
  $region42: #{forward.1} parent=0 // pred_check
    _
  $region43: #{forward.1} parent=0 // pred_check_branch
    %45 = sbr.rel (0) target = $region45
  $region44: #{forward.1} parent=0 // pred_region
    _
  $region45: #{forward.1} parent=0 // pred_fallthru
    _
  // Predicated region
  $region46: #{forward.1} parent=0 // pred_check
    _
  $region47: #{forward.1} parent=0 // pred_check_branch
    %47 = sbr.rel (0) target = $region49
  $region48: #{forward.1} parent=0 // pred_region
    _
  $region49: #{forward.1} parent=0 // pred_fallthru
    _
  // Predicated region
  $region50: #{forward.1} parent=0 // pred_check
    _
  $region51: #{forward.1} parent=0 // pred_check_branch
    %49 = sbr.rel (0) target = $region53
  $region52: #{forward.1} parent=0 // pred_region
    _
  $region53: #{forward.1} parent=0 // pred_fallthru
    _
  // Predicated region
  $region54: #{forward.1} parent=0 // pred_check
    _
  $region55: #{forward.1} parent=0 // pred_check_branch
    %51 = sbr.rel (0) target = $region57
  $region56: #{forward.1} parent=0 // pred_region
    _
  $region57: #{forward.1} parent=0 // pred_fallthru
    _
  // Predicated region
  $region58: #{forward.1} parent=0 // pred_check
    _
  $region59: #{forward.1} parent=0 // pred_check_branch
    %53 = sbr.rel (0) target = $region61
  $region60: #{forward.1} parent=0 // pred_region
    _
  $region61: #{forward.1} parent=0 // pred_fallthru
    _
  // Predicated region
  $region62: #{forward.1} parent=0 // pred_check
    _
  $region63: #{forward.1} parent=0 // pred_check_branch
    %55 = sbr.rel (0) target = $region65
  $region64: #{forward.1} parent=0 // pred_region
    _
  $region65: #{forward.1} parent=0 // pred_fallthru
    _
  // Predicated region
  $region66: #{forward.1} parent=0 // pred_check
    _
  $region67: #{forward.1} parent=0 // pred_check_branch
    %57 = sbr.rel (0) target = $region69
  $region68: #{forward.1} parent=0 // pred_region
    _
  $region69: #{forward.1} parent=0 // pred_fallthru
    _
  // Predicated region
  $region70: #{forward.1} parent=0 // pred_check
    _
  $region71: #{forward.1} parent=0 // pred_check_branch
    %59 = sbr.rel (0) target = $region73
  $region72: #{forward.1} parent=0 // pred_region
    _
  $region73: #{forward.1} parent=0 // pred_fallthru
    _
  // Predicated region
  $region74: #{forward.1} parent=0 // pred_check
    _
  $region75: #{forward.1} parent=0 // pred_check_branch
    %61 = sbr.rel (0) target = $region77
  $region76: #{forward.1} parent=0 // pred_region
    _
  $region77: #{forward.1} parent=0 // pred_fallthru
    _
  %v63 = vld [vmem:[%s0] sm:$0xff]
  %v64 = vld [vmem:[%s0 + $0x8] sm:$0xff]
  %v65 = vld [vmem:[%s1] sm:$0x1]
  %v66 = vld [vmem:[%s1 + $0x1] sm:$0x1]
  %v67 = vld [vmem:[%s2] sm:$0x1]
  %v68 = vld [vmem:[%s3] sm:$0x1]
  %vm69 = vcmask 261120
  %v70 = vsel %vm69, %v63, 0.0
  %71 = vadd.xlane.f32.xlu0 %v70
  %v72 = vpop.xlane.xlu0 %71
  %v73 = vsel %vm69, %v64, 0.0
  %74 = vadd.xlane.f32.xlu0 %v73
  %v75 = vpop.xlane.xlu0 %74
  %v76 = vrcp.pop 32.0
  %v77 = vmul.f32 %v72, %v76
  %v78 = vmul.f32 %v75, %v76
  %v79 = vsub.f32 %v63, %v77
  %v80 = vsub.f32 %v64, %v78
  %v81 = vmul.f32 %v79, %v79
  %v82 = vmul.f32 %v80, %v80
  %v83 = vsel %vm69, %v81, 0.0
  %84 = vadd.xlane.f32.xlu0 %v83
  %v85 = vpop.xlane.xlu0 %84
  %v86 = vsel %vm69, %v82, 0.0
  %87 = vadd.xlane.f32.xlu0 %v86
  %v88 = vpop.xlane.xlu0 %87
  %v89 = vmul.f32 %v85, %v76
  %v90 = vmul.f32 %v88, %v76
  %v91 = vadd.f32 %v89, 1e-12
  %v92 = vadd.f32 %v90, 1e-12
  %v93 = vrsqrt.pop %v91
  %v94 = vrsqrt.pop %v92
  %v95 = vmul.f32 %v79, %v93
  %v96 = vmul.f32 %v80, %v94
  %v98 = vlaneseq
  %v99 = vshrl.u32 %v98, 7
  %v100 = vsub.s32 0, %v99
  %v101 = vrot.slane %v67, %v100
  %v103 = vmul.f32 %v95, %v101
  %v104 = vmul.f32 %v96, %v101
  %v106 = vlaneseq
  %v107 = vshrl.u32 %v106, 7
  %v108 = vsub.s32 0, %v107
  %v109 = vrot.slane %v68, %v108
  %v111 = vadd.f32 %v103, %v109
  %v112 = vadd.f32 %v104, %v109
  %v113 = vpack.c.bf16 %v112, %v111
  %v114 = vld [vmem:[%s4] sm:$0xf]
  %v115 = vld [vmem:[%s4 + $0x4] sm:$0xf]
  %v116 = vld [vmem:[%s4 + $0x8] sm:$0xf]
  %v117 = vld [vmem:[%s4 + $0xc] sm:$0xf]
  %v118 = vld [vmem:[%s5] sm:$0x1]
  %v120 = vlaneseq
  %v121 = vshrl.u32 %v120, 7
  %v122 = vsub.s32 0, %v121
  %v123 = vrot.slane %v118, %v122
  %v129 = vunpack.c.l.b16 %v114
  %v130 = vunpack.c.l.b16 %v115
  %v131 = vunpack.c.l.b16 %v116
  %v132 = vunpack.c.l.b16 %v117
  %v133 = vpack.c.b16 %v130, %v129
  %v134 = vpack.c.b16 %v132, %v131
  %v138 = vsel %vm69, %v113, 0
  %140 = vmatprep.subr.bf16.mxu0 0
  %141 = vmatpush1.bf16.msra.mxu0 0
  %142 = vmatprep.subr.bf16.mxu0 0
  %143 = vmatpush1.bf16.msra.mxu0 0
  %144 = vmatprep.subr.bf16.mxu0 0
  %145 = vmatpush1.bf16.msra.mxu0 0
  %146 = vmatprep.subr.bf16.mxu0 0
  %147 = vmatpush1.bf16.msra.mxu0 0
  %148 = vmatprep.subr.bf16.mxu0 0
  %149 = vmatpush1.bf16.msra.mxu0 0
  %150 = vmatprep.subr.bf16.mxu0 0
  %151 = vmatpush1.bf16.msra.mxu0 0
  %152 = vmatprep.subr.bf16.mxu0 0
  %153 = vmatpush1.bf16.msra.mxu0 %v134
  %154 = vmatprep.subr.bf16.mxu0 0
  %155 = vmatpush1.bf16.msra.mxu0 %v133
  %156 = vmatprep.subr.bf16.mxu0 0
  %157 = vmatpush2.bf16.msra.mxu0 0
  %158 = vmatprep.subr.bf16.mxu0 0
  %159 = vmatpush2.bf16.msra.mxu0 0
  %160 = vmatprep.subr.bf16.mxu0 0
  %161 = vmatpush2.bf16.msra.mxu0 0
  %162 = vmatprep.subr.bf16.mxu0 0
  %163 = vmatpush2.bf16.msra.mxu0 0
  %164 = vmatprep.subr.bf16.mxu0 0
  %165 = vmatpush2.bf16.msra.mxu0 0
  %166 = vmatprep.subr.bf16.mxu0 0
  %167 = vmatpush2.bf16.msra.mxu0 0
  %168 = vmatprep.subr.bf16.mxu0 0
  %169 = vmatpush2.bf16.msra.mxu0 0
  %170 = vmatprep.subr.bf16.mxu0 0
  %171 = vmatpush2.bf16.msra.mxu0 0
  %172 = vmatprep.mubr.bf16.mxu0 0
  %173 = vmatmul.mubr.bf16.gmra.mxu0 %v138
  %v174 = vpop.f32.mrf.mxu0
  %v175 = vadd.f32 %v123, %v174
  %v176 = vpop.f32.mrf.mxu0
  %v177 = vpop.f32.mrf.mxu0
  %v178 = vadd.f32 %v123, %v177
  %v179 = vpop.f32.mrf.mxu0
  %180 = vdwg.mxu0
  %v181 = vpack.c.bf16 %v175, %v175
  %v182 = vpack.c.bf16 %v178, %v178
  %184 = vrot.lane.b32.xlu0 %v181, 96
  %v185 = vpop.permute.xlu0 %184
  %vm186 = vcmask 130048
  %v188 = vsel %vm186, %v181, 0
  %v191 = vsel %vm186, %v185, 0
  %193 = vmatprep.subr.bf16.mxu0 0
  %194 = vmatpush1.bf16.xpose.msra.mxu0 0
  %195 = vmatprep.subr.bf16.mxu0 0
  %196 = vmatpush1.bf16.xpose.msra.mxu0 0
  %197 = vmatprep.subr.bf16.mxu0 0
  %198 = vmatpush1.bf16.xpose.msra.mxu0 0
  %199 = vmatprep.subr.bf16.mxu0 0
  %200 = vmatpush1.bf16.xpose.msra.mxu0 0
  %201 = vmatprep.subr.bf16.mxu0 0
  %202 = vmatpush1.bf16.xpose.msra.mxu0 0
  %203 = vmatprep.subr.bf16.mxu0 0
  %204 = vmatpush1.bf16.xpose.msra.mxu0 0
  %205 = vmatprep.subr.bf16.mxu0 0
  %206 = vmatpush1.bf16.xpose.msra.mxu0 0
  %207 = vmatprep.subr.bf16.mxu0 0
  %208 = vmatpush1.bf16.xpose.msra.mxu0 %v191
  %209 = vmatprep.subr.bf16.mxu0 0
  %210 = vmatpush2.bf16.xpose.msra.mxu0 0
  %211 = vmatprep.subr.bf16.mxu0 0
  %212 = vmatpush2.bf16.xpose.msra.mxu0 0
  %213 = vmatprep.subr.bf16.mxu0 0
  %214 = vmatpush2.bf16.xpose.msra.mxu0 0
  %215 = vmatprep.subr.bf16.mxu0 0
  %216 = vmatpush2.bf16.xpose.msra.mxu0 0
  %217 = vmatprep.subr.bf16.mxu0 0
  %218 = vmatpush2.bf16.xpose.msra.mxu0 0
  %219 = vmatprep.subr.bf16.mxu0 0
  %220 = vmatpush2.bf16.xpose.msra.mxu0 0
  %221 = vmatprep.subr.bf16.mxu0 0
  %222 = vmatpush2.bf16.xpose.msra.mxu0 0
  %223 = vmatprep.subr.bf16.mxu0 0
  %224 = vmatpush2.bf16.xpose.msra.mxu0 0
  %225 = vmatprep.mubr.bf16.mxu0 0
  %226 = vmatmul.mubr.bf16.gmra.mxu0 %v188
  %v227 = vpop.f32.mrf.mxu0
  %v228 = vadd.f32 0.0, %v227
  %v229 = vpop.f32.mrf.mxu0
  %v230 = vpop.f32.mrf.mxu0
  %v231 = vpop.f32.mrf.mxu0
  %232 = vdwg.mxu0
  %234 = vrot.lane.b32.xlu0 %v182, 96
  %v235 = vpop.permute.xlu0 %234
  %v237 = vsel %vm186, %v182, 0
  %v240 = vsel %vm186, %v235, 0
  %242 = vmatprep.subr.bf16.mxu0 0
  %243 = vmatpush1.bf16.xpose.msra.mxu0 0
  %244 = vmatprep.subr.bf16.mxu0 0
  %245 = vmatpush1.bf16.xpose.msra.mxu0 0
  %246 = vmatprep.subr.bf16.mxu0 0
  %247 = vmatpush1.bf16.xpose.msra.mxu0 0
  %248 = vmatprep.subr.bf16.mxu0 0
  %249 = vmatpush1.bf16.xpose.msra.mxu0 0
  %250 = vmatprep.subr.bf16.mxu0 0
  %251 = vmatpush1.bf16.xpose.msra.mxu0 0
  %252 = vmatprep.subr.bf16.mxu0 0
  %253 = vmatpush1.bf16.xpose.msra.mxu0 0
  %254 = vmatprep.subr.bf16.mxu0 0
  %255 = vmatpush1.bf16.xpose.msra.mxu0 0
  %256 = vmatprep.subr.bf16.mxu0 0
  %257 = vmatpush1.bf16.xpose.msra.mxu0 %v240
  %258 = vmatprep.subr.bf16.mxu0 0
  %259 = vmatpush2.bf16.xpose.msra.mxu0 0
  %260 = vmatprep.subr.bf16.mxu0 0
  %261 = vmatpush2.bf16.xpose.msra.mxu0 0
  %262 = vmatprep.subr.bf16.mxu0 0
  %263 = vmatpush2.bf16.xpose.msra.mxu0 0
  %264 = vmatprep.subr.bf16.mxu0 0
  %265 = vmatpush2.bf16.xpose.msra.mxu0 0
  %266 = vmatprep.subr.bf16.mxu0 0
  %267 = vmatpush2.bf16.xpose.msra.mxu0 0
  %268 = vmatprep.subr.bf16.mxu0 0
  %269 = vmatpush2.bf16.xpose.msra.mxu0 0
  %270 = vmatprep.subr.bf16.mxu0 0
  %271 = vmatpush2.bf16.xpose.msra.mxu0 0
  %272 = vmatprep.subr.bf16.mxu0 0
  %273 = vmatpush2.bf16.xpose.msra.mxu0 0
  %274 = vmatprep.mubr.bf16.mxu0 0
  %275 = vmatmul.mubr.bf16.gmra.mxu0 %v237
  %v276 = vpop.f32.mrf.mxu0
  %v277 = vadd.f32 0.0, %v276
  %v278 = vpop.f32.mrf.mxu0
  %v279 = vpop.f32.mrf.mxu0
  %v280 = vpop.f32.mrf.mxu0
  %281 = vdwg.mxu0
  %v282 = vmul.f32 %v228, 0.25
  %v283 = vmul.f32 %v277, 0.25
  %v286 = vlaneseq
  %v287 = vshrl.u32 %v286, 7
  %v288 = vsub.s32 0, %v287
  %v289 = vrot.slane %v65, %v288
  %v290 = vlaneseq
  %v291 = vshrl.u32 %v290, 7
  %v292 = vsub.s32 0, %v291
  %v293 = vrot.slane %v66, %v292
  %v296 = vadd.f32 %v282, %v289
  %v297 = vadd.f32 %v283, %v293
  %vm298 = vcmask 64512
  %v299 = vsel %vm298, %v296, -inf
  %300 = vmax.xlane.f32.xlu0 %v299
  %v301 = vpop.xlane.xlu0 %300
  %v302 = vsel %vm298, %v297, -inf
  %303 = vmax.xlane.f32.xlu0 %v302
  %v304 = vpop.xlane.xlu0 %303
  %v305 = vsub.f32 %v296, %v301
  %v306 = vsub.f32 %v297, %v304
  %v307 = vmul.f32 %v305, 1.442695
  %v308 = vpow.pop %v307
  %v309 = vmul.f32 %v306, 1.442695
  %v310 = vpow.pop %v309
  %v311 = vsel %vm298, %v308, 0.0
  %312 = vadd.xlane.f32.xlu0 %v311
  %v313 = vpop.xlane.xlu0 %312
  %v314 = vsel %vm298, %v310, 0.0
  %315 = vadd.xlane.f32.xlu0 %v314
  %v316 = vpop.xlane.xlu0 %315
  %v317 = vrcp.pop %v313
  %v318 = vrcp.pop %v316
  %v319 = vmul.f32 %v308, %v317
  %v320 = vmul.f32 %v310, %v318
  %v321 = vpack.c.bf16 %v319, %v319
  %v322 = vpack.c.bf16 %v320, %v320
  %323 = vrot.lane.b32.xlu0 %v181, 64
  %v324 = vpop.permute.xlu0 %323
  %v326 = vsel %vm298, %v321, 0
  %vm328 = vcmask 1043456
  %v330 = vsel %vm328, %v324, 0
  %332 = vmatprep.subr.bf16.mxu0 0
  %333 = vmatpush1.bf16.msra.mxu0 0
  %334 = vmatprep.subr.bf16.mxu0 0
  %335 = vmatpush1.bf16.msra.mxu0 0
  %336 = vmatprep.subr.bf16.mxu0 0
  %337 = vmatpush1.bf16.msra.mxu0 0
  %338 = vmatprep.subr.bf16.mxu0 0
  %339 = vmatpush1.bf16.msra.mxu0 0
  %340 = vmatprep.subr.bf16.mxu0 0
  %341 = vmatpush1.bf16.msra.mxu0 0
  %342 = vmatprep.subr.bf16.mxu0 0
  %343 = vmatpush1.bf16.msra.mxu0 0
  %344 = vmatprep.subr.bf16.mxu0 0
  %345 = vmatpush1.bf16.msra.mxu0 0
  %346 = vmatprep.subr.bf16.mxu0 0
  %347 = vmatpush1.bf16.msra.mxu0 %v330
  %348 = vmatprep.subr.bf16.mxu0 0
  %349 = vmatpush2.bf16.msra.mxu0 0
  %350 = vmatprep.subr.bf16.mxu0 0
  %351 = vmatpush2.bf16.msra.mxu0 0
  %352 = vmatprep.subr.bf16.mxu0 0
  %353 = vmatpush2.bf16.msra.mxu0 0
  %354 = vmatprep.subr.bf16.mxu0 0
  %355 = vmatpush2.bf16.msra.mxu0 0
  %356 = vmatprep.subr.bf16.mxu0 0
  %357 = vmatpush2.bf16.msra.mxu0 0
  %358 = vmatprep.subr.bf16.mxu0 0
  %359 = vmatpush2.bf16.msra.mxu0 0
  %360 = vmatprep.subr.bf16.mxu0 0
  %361 = vmatpush2.bf16.msra.mxu0 0
  %362 = vmatprep.subr.bf16.mxu0 0
  %363 = vmatpush2.bf16.msra.mxu0 0
  %364 = vmatprep.mubr.bf16.mxu0 0
  %365 = vmatmul.mubr.bf16.gmra.mxu0 %v326
  %v366 = vpop.f32.mrf.mxu0
  %v367 = vadd.f32 0.0, %v366
  %v368 = vpop.f32.mrf.mxu0
  %v369 = vpop.f32.mrf.mxu0
  %v370 = vpop.f32.mrf.mxu0
  %371 = vdwg.mxu0
  %372 = vrot.lane.b32.xlu0 %v182, 64
  %v373 = vpop.permute.xlu0 %372
  %v375 = vsel %vm298, %v322, 0
  %v378 = vsel %vm328, %v373, 0
  %380 = vmatprep.subr.bf16.mxu0 0
  %381 = vmatpush1.bf16.msra.mxu0 0
  %382 = vmatprep.subr.bf16.mxu0 0
  %383 = vmatpush1.bf16.msra.mxu0 0
  %384 = vmatprep.subr.bf16.mxu0 0
  %385 = vmatpush1.bf16.msra.mxu0 0
  %386 = vmatprep.subr.bf16.mxu0 0
  %387 = vmatpush1.bf16.msra.mxu0 0
  %388 = vmatprep.subr.bf16.mxu0 0
  %389 = vmatpush1.bf16.msra.mxu0 0
  %390 = vmatprep.subr.bf16.mxu0 0
  %391 = vmatpush1.bf16.msra.mxu0 0
  %392 = vmatprep.subr.bf16.mxu0 0
  %393 = vmatpush1.bf16.msra.mxu0 0
  %394 = vmatprep.subr.bf16.mxu0 0
  %395 = vmatpush1.bf16.msra.mxu0 %v378
  %396 = vmatprep.subr.bf16.mxu0 0
  %397 = vmatpush2.bf16.msra.mxu0 0
  %398 = vmatprep.subr.bf16.mxu0 0
  %399 = vmatpush2.bf16.msra.mxu0 0
  %400 = vmatprep.subr.bf16.mxu0 0
  %401 = vmatpush2.bf16.msra.mxu0 0
  %402 = vmatprep.subr.bf16.mxu0 0
  %403 = vmatpush2.bf16.msra.mxu0 0
  %404 = vmatprep.subr.bf16.mxu0 0
  %405 = vmatpush2.bf16.msra.mxu0 0
  %406 = vmatprep.subr.bf16.mxu0 0
  %407 = vmatpush2.bf16.msra.mxu0 0
  %408 = vmatprep.subr.bf16.mxu0 0
  %409 = vmatpush2.bf16.msra.mxu0 0
  %410 = vmatprep.subr.bf16.mxu0 0
  %411 = vmatpush2.bf16.msra.mxu0 0
  %412 = vmatprep.mubr.bf16.mxu0 0
  %413 = vmatmul.mubr.bf16.gmra.mxu0 %v375
  %v414 = vpop.f32.mrf.mxu0
  %v415 = vadd.f32 0.0, %v414
  %v416 = vpop.f32.mrf.mxu0
  %v417 = vpop.f32.mrf.mxu0
  %v418 = vpop.f32.mrf.mxu0
  %419 = vdwg.mxu0
  %420 = vrot.lane.b32.xlu0 %v181, 112
  %v421 = vpop.permute.xlu0 %420
  %422 = vrot.lane.b32.xlu0 %v181, 80
  %v423 = vpop.permute.xlu0 %422
  %v425 = vsel %vm186, %v421, 0
  %v428 = vsel %vm186, %v423, 0
  %430 = vmatprep.subr.bf16.mxu0 0
  %431 = vmatpush1.bf16.xpose.msra.mxu0 0
  %432 = vmatprep.subr.bf16.mxu0 0
  %433 = vmatpush1.bf16.xpose.msra.mxu0 0
  %434 = vmatprep.subr.bf16.mxu0 0
  %435 = vmatpush1.bf16.xpose.msra.mxu0 0
  %436 = vmatprep.subr.bf16.mxu0 0
  %437 = vmatpush1.bf16.xpose.msra.mxu0 0
  %438 = vmatprep.subr.bf16.mxu0 0
  %439 = vmatpush1.bf16.xpose.msra.mxu0 0
  %440 = vmatprep.subr.bf16.mxu0 0
  %441 = vmatpush1.bf16.xpose.msra.mxu0 0
  %442 = vmatprep.subr.bf16.mxu0 0
  %443 = vmatpush1.bf16.xpose.msra.mxu0 0
  %444 = vmatprep.subr.bf16.mxu0 0
  %445 = vmatpush1.bf16.xpose.msra.mxu0 %v428
  %446 = vmatprep.subr.bf16.mxu0 0
  %447 = vmatpush2.bf16.xpose.msra.mxu0 0
  %448 = vmatprep.subr.bf16.mxu0 0
  %449 = vmatpush2.bf16.xpose.msra.mxu0 0
  %450 = vmatprep.subr.bf16.mxu0 0
  %451 = vmatpush2.bf16.xpose.msra.mxu0 0
  %452 = vmatprep.subr.bf16.mxu0 0
  %453 = vmatpush2.bf16.xpose.msra.mxu0 0
  %454 = vmatprep.subr.bf16.mxu0 0
  %455 = vmatpush2.bf16.xpose.msra.mxu0 0
  %456 = vmatprep.subr.bf16.mxu0 0
  %457 = vmatpush2.bf16.xpose.msra.mxu0 0
  %458 = vmatprep.subr.bf16.mxu0 0
  %459 = vmatpush2.bf16.xpose.msra.mxu0 0
  %460 = vmatprep.subr.bf16.mxu0 0
  %461 = vmatpush2.bf16.xpose.msra.mxu0 0
  %462 = vmatprep.mubr.bf16.mxu0 0
  %463 = vmatmul.mubr.bf16.gmra.mxu0 %v425
  %v464 = vpop.f32.mrf.mxu0
  %v465 = vadd.f32 0.0, %v464
  %v466 = vpop.f32.mrf.mxu0
  %v467 = vpop.f32.mrf.mxu0
  %v468 = vpop.f32.mrf.mxu0
  %469 = vdwg.mxu0
  %470 = vrot.lane.b32.xlu0 %v182, 112
  %v471 = vpop.permute.xlu0 %470
  %472 = vrot.lane.b32.xlu0 %v182, 80
  %v473 = vpop.permute.xlu0 %472
  %v475 = vsel %vm186, %v471, 0
  %v478 = vsel %vm186, %v473, 0
  %480 = vmatprep.subr.bf16.mxu0 0
  %481 = vmatpush1.bf16.xpose.msra.mxu0 0
  %482 = vmatprep.subr.bf16.mxu0 0
  %483 = vmatpush1.bf16.xpose.msra.mxu0 0
  %484 = vmatprep.subr.bf16.mxu0 0
  %485 = vmatpush1.bf16.xpose.msra.mxu0 0
  %486 = vmatprep.subr.bf16.mxu0 0
  %487 = vmatpush1.bf16.xpose.msra.mxu0 0
  %488 = vmatprep.subr.bf16.mxu0 0
  %489 = vmatpush1.bf16.xpose.msra.mxu0 0
  %490 = vmatprep.subr.bf16.mxu0 0
  %491 = vmatpush1.bf16.xpose.msra.mxu0 0
  %492 = vmatprep.subr.bf16.mxu0 0
  %493 = vmatpush1.bf16.xpose.msra.mxu0 0
  %494 = vmatprep.subr.bf16.mxu0 0
  %495 = vmatpush1.bf16.xpose.msra.mxu0 %v478
  %496 = vmatprep.subr.bf16.mxu0 0
  %497 = vmatpush2.bf16.xpose.msra.mxu0 0
  %498 = vmatprep.subr.bf16.mxu0 0
  %499 = vmatpush2.bf16.xpose.msra.mxu0 0
  %500 = vmatprep.subr.bf16.mxu0 0
  %501 = vmatpush2.bf16.xpose.msra.mxu0 0
  %502 = vmatprep.subr.bf16.mxu0 0
  %503 = vmatpush2.bf16.xpose.msra.mxu0 0
  %504 = vmatprep.subr.bf16.mxu0 0
  %505 = vmatpush2.bf16.xpose.msra.mxu0 0
  %506 = vmatprep.subr.bf16.mxu0 0
  %507 = vmatpush2.bf16.xpose.msra.mxu0 0
  %508 = vmatprep.subr.bf16.mxu0 0
  %509 = vmatpush2.bf16.xpose.msra.mxu0 0
  %510 = vmatprep.subr.bf16.mxu0 0
  %511 = vmatpush2.bf16.xpose.msra.mxu0 0
  %512 = vmatprep.mubr.bf16.mxu0 0
  %513 = vmatmul.mubr.bf16.gmra.mxu0 %v475
  %v514 = vpop.f32.mrf.mxu0
  %v515 = vadd.f32 0.0, %v514
  %v516 = vpop.f32.mrf.mxu0
  %v517 = vpop.f32.mrf.mxu0
  %v518 = vpop.f32.mrf.mxu0
  %519 = vdwg.mxu0
  %v520 = vmul.f32 %v465, 0.25
  %v521 = vmul.f32 %v515, 0.25
  %v522 = vadd.f32 %v520, %v289
  %v523 = vadd.f32 %v521, %v293
  %v524 = vsel %vm298, %v522, -inf
  %525 = vmax.xlane.f32.xlu0 %v524
  %v526 = vpop.xlane.xlu0 %525
  %v527 = vsel %vm298, %v523, -inf
  %528 = vmax.xlane.f32.xlu0 %v527
  %v529 = vpop.xlane.xlu0 %528
  %v530 = vsub.f32 %v522, %v526
  %v531 = vsub.f32 %v523, %v529
  %v532 = vmul.f32 %v530, 1.442695
  %v533 = vpow.pop %v532
  %v534 = vmul.f32 %v531, 1.442695
  %v535 = vpow.pop %v534
  %v536 = vsel %vm298, %v533, 0.0
  %537 = vadd.xlane.f32.xlu0 %v536
  %v538 = vpop.xlane.xlu0 %537
  %v539 = vsel %vm298, %v535, 0.0
  %540 = vadd.xlane.f32.xlu0 %v539
  %v541 = vpop.xlane.xlu0 %540
  %v542 = vrcp.pop %v538
  %v543 = vrcp.pop %v541
  %v544 = vmul.f32 %v533, %v542
  %v545 = vmul.f32 %v535, %v543
  %v546 = vpack.c.bf16 %v544, %v544
  %v547 = vpack.c.bf16 %v545, %v545
  %548 = vrot.lane.b32.xlu0 %v181, 48
  %v549 = vpop.permute.xlu0 %548
  %v551 = vsel %vm298, %v546, 0
  %v554 = vsel %vm328, %v549, 0
  %556 = vmatprep.subr.bf16.mxu0 0
  %557 = vmatpush1.bf16.msra.mxu0 0
  %558 = vmatprep.subr.bf16.mxu0 0
  %559 = vmatpush1.bf16.msra.mxu0 0
  %560 = vmatprep.subr.bf16.mxu0 0
  %561 = vmatpush1.bf16.msra.mxu0 0
  %562 = vmatprep.subr.bf16.mxu0 0
  %563 = vmatpush1.bf16.msra.mxu0 0
  %564 = vmatprep.subr.bf16.mxu0 0
  %565 = vmatpush1.bf16.msra.mxu0 0
  %566 = vmatprep.subr.bf16.mxu0 0
  %567 = vmatpush1.bf16.msra.mxu0 0
  %568 = vmatprep.subr.bf16.mxu0 0
  %569 = vmatpush1.bf16.msra.mxu0 0
  %570 = vmatprep.subr.bf16.mxu0 0
  %571 = vmatpush1.bf16.msra.mxu0 %v554
  %572 = vmatprep.subr.bf16.mxu0 0
  %573 = vmatpush2.bf16.msra.mxu0 0
  %574 = vmatprep.subr.bf16.mxu0 0
  %575 = vmatpush2.bf16.msra.mxu0 0
  %576 = vmatprep.subr.bf16.mxu0 0
  %577 = vmatpush2.bf16.msra.mxu0 0
  %578 = vmatprep.subr.bf16.mxu0 0
  %579 = vmatpush2.bf16.msra.mxu0 0
  %580 = vmatprep.subr.bf16.mxu0 0
  %581 = vmatpush2.bf16.msra.mxu0 0
  %582 = vmatprep.subr.bf16.mxu0 0
  %583 = vmatpush2.bf16.msra.mxu0 0
  %584 = vmatprep.subr.bf16.mxu0 0
  %585 = vmatpush2.bf16.msra.mxu0 0
  %586 = vmatprep.subr.bf16.mxu0 0
  %587 = vmatpush2.bf16.msra.mxu0 0
  %588 = vmatprep.mubr.bf16.mxu0 0
  %589 = vmatmul.mubr.bf16.gmra.mxu0 %v551
  %v590 = vpop.f32.mrf.mxu0
  %v591 = vadd.f32 0.0, %v590
  %v592 = vpop.f32.mrf.mxu0
  %v593 = vpop.f32.mrf.mxu0
  %v594 = vpop.f32.mrf.mxu0
  %595 = vdwg.mxu0
  %596 = vrot.lane.b32.xlu0 %v182, 48
  %v597 = vpop.permute.xlu0 %596
  %v599 = vsel %vm298, %v547, 0
  %v602 = vsel %vm328, %v597, 0
  %604 = vmatprep.subr.bf16.mxu0 0
  %605 = vmatpush1.bf16.msra.mxu0 0
  %606 = vmatprep.subr.bf16.mxu0 0
  %607 = vmatpush1.bf16.msra.mxu0 0
  %608 = vmatprep.subr.bf16.mxu0 0
  %609 = vmatpush1.bf16.msra.mxu0 0
  %610 = vmatprep.subr.bf16.mxu0 0
  %611 = vmatpush1.bf16.msra.mxu0 0
  %612 = vmatprep.subr.bf16.mxu0 0
  %613 = vmatpush1.bf16.msra.mxu0 0
  %614 = vmatprep.subr.bf16.mxu0 0
  %615 = vmatpush1.bf16.msra.mxu0 0
  %616 = vmatprep.subr.bf16.mxu0 0
  %617 = vmatpush1.bf16.msra.mxu0 0
  %618 = vmatprep.subr.bf16.mxu0 0
  %619 = vmatpush1.bf16.msra.mxu0 %v602
  %620 = vmatprep.subr.bf16.mxu0 0
  %621 = vmatpush2.bf16.msra.mxu0 0
  %622 = vmatprep.subr.bf16.mxu0 0
  %623 = vmatpush2.bf16.msra.mxu0 0
  %624 = vmatprep.subr.bf16.mxu0 0
  %625 = vmatpush2.bf16.msra.mxu0 0
  %626 = vmatprep.subr.bf16.mxu0 0
  %627 = vmatpush2.bf16.msra.mxu0 0
  %628 = vmatprep.subr.bf16.mxu0 0
  %629 = vmatpush2.bf16.msra.mxu0 0
  %630 = vmatprep.subr.bf16.mxu0 0
  %631 = vmatpush2.bf16.msra.mxu0 0
  %632 = vmatprep.subr.bf16.mxu0 0
  %633 = vmatpush2.bf16.msra.mxu0 0
  %634 = vmatprep.subr.bf16.mxu0 0
  %635 = vmatpush2.bf16.msra.mxu0 0
  %636 = vmatprep.mubr.bf16.mxu0 0
  %637 = vmatmul.mubr.bf16.gmra.mxu0 %v599
  %v638 = vpop.f32.mrf.mxu0
  %v639 = vadd.f32 0.0, %v638
  %v640 = vpop.f32.mrf.mxu0
  %v641 = vpop.f32.mrf.mxu0
  %v642 = vpop.f32.mrf.mxu0
  %643 = vdwg.mxu0
  %646 = vrot.lane.b32.xlu0 %v591, 16
  %v647 = vpop.permute.xlu0 %646
  %648 = vrot.lane.b32.xlu0 %v639, 16
  %v649 = vpop.permute.xlu0 %648
  %v652 = vsel %vm186, %v367, %v647
  %v653 = vsel %vm186, %v415, %v649
  %v654 = vpack.c.bf16 %v653, %v652
  %v655 = vld [vmem:[%s6] sm:$0xf]
  %v656 = vld [vmem:[%s6 + $0x4] sm:$0xf]
  %v657 = vld [vmem:[%s6 + $0x8] sm:$0xf]
  %v658 = vld [vmem:[%s6 + $0xc] sm:$0xf]
  %v659 = vld [vmem:[%s7] sm:$0x1]
  %v661 = vlaneseq
  %v662 = vshrl.u32 %v661, 7
  %v663 = vsub.s32 0, %v662
  %v664 = vrot.slane %v659, %v663
  %v670 = vunpack.c.l.b16 %v655
  %v671 = vunpack.c.l.b16 %v656
  %v672 = vunpack.c.l.b16 %v657
  %v673 = vunpack.c.l.b16 %v658
  %v674 = vpack.c.b16 %v671, %v670
  %v675 = vpack.c.b16 %v673, %v672
  %v679 = vsel %vm69, %v654, 0
  %681 = vmatprep.subr.bf16.mxu0 0
  %682 = vmatpush1.bf16.msra.mxu0 0
  %683 = vmatprep.subr.bf16.mxu0 0
  %684 = vmatpush1.bf16.msra.mxu0 0
  %685 = vmatprep.subr.bf16.mxu0 0
  %686 = vmatpush1.bf16.msra.mxu0 0
  %687 = vmatprep.subr.bf16.mxu0 0
  %688 = vmatpush1.bf16.msra.mxu0 0
  %689 = vmatprep.subr.bf16.mxu0 0
  %690 = vmatpush1.bf16.msra.mxu0 0
  %691 = vmatprep.subr.bf16.mxu0 0
  %692 = vmatpush1.bf16.msra.mxu0 0
  %693 = vmatprep.subr.bf16.mxu0 0
  %694 = vmatpush1.bf16.msra.mxu0 %v675
  %695 = vmatprep.subr.bf16.mxu0 0
  %696 = vmatpush1.bf16.msra.mxu0 %v674
  %697 = vmatprep.subr.bf16.mxu0 0
  %698 = vmatpush2.bf16.msra.mxu0 0
  %699 = vmatprep.subr.bf16.mxu0 0
  %700 = vmatpush2.bf16.msra.mxu0 0
  %701 = vmatprep.subr.bf16.mxu0 0
  %702 = vmatpush2.bf16.msra.mxu0 0
  %703 = vmatprep.subr.bf16.mxu0 0
  %704 = vmatpush2.bf16.msra.mxu0 0
  %705 = vmatprep.subr.bf16.mxu0 0
  %706 = vmatpush2.bf16.msra.mxu0 0
  %707 = vmatprep.subr.bf16.mxu0 0
  %708 = vmatpush2.bf16.msra.mxu0 0
  %709 = vmatprep.subr.bf16.mxu0 0
  %710 = vmatpush2.bf16.msra.mxu0 0
  %711 = vmatprep.subr.bf16.mxu0 0
  %712 = vmatpush2.bf16.msra.mxu0 0
  %713 = vmatprep.mubr.bf16.mxu0 0
  %714 = vmatmul.mubr.bf16.gmra.mxu0 %v679
  %v715 = vpop.f32.mrf.mxu0
  %v716 = vadd.f32 %v664, %v715
  %v717 = vpop.f32.mrf.mxu0
  %v718 = vpop.f32.mrf.mxu0
  %v719 = vadd.f32 %v664, %v718
  %v720 = vpop.f32.mrf.mxu0
  %721 = vdwg.mxu0
  %v722 = vadd.f32 %v111, %v716
  %v723 = vadd.f32 %v112, %v719
  %v724 = vld [vmem:[%s8] sm:$0x1]
  %v725 = vld [vmem:[%s9] sm:$0x1]
  %v726 = vsel %vm69, %v722, 0.0
  %727 = vadd.xlane.f32.xlu0 %v726
  %v728 = vpop.xlane.xlu0 %727
  %v729 = vsel %vm69, %v723, 0.0
  %730 = vadd.xlane.f32.xlu0 %v729
  %v731 = vpop.xlane.xlu0 %730
  %v732 = vmul.f32 %v728, %v76
  %v733 = vmul.f32 %v731, %v76
  %v734 = vsub.f32 %v722, %v732
  %v735 = vsub.f32 %v723, %v733
  %v736 = vmul.f32 %v734, %v734
  %v737 = vmul.f32 %v735, %v735
  %v738 = vsel %vm69, %v736, 0.0
  %739 = vadd.xlane.f32.xlu0 %v738
  %v740 = vpop.xlane.xlu0 %739
  %v741 = vsel %vm69, %v737, 0.0
  %742 = vadd.xlane.f32.xlu0 %v741
  %v743 = vpop.xlane.xlu0 %742
  %v744 = vmul.f32 %v740, %v76
  %v745 = vmul.f32 %v743, %v76
  %v746 = vadd.f32 %v744, 1e-12
  %v747 = vadd.f32 %v745, 1e-12
  %v748 = vrsqrt.pop %v746
  %v749 = vrsqrt.pop %v747
  %v750 = vmul.f32 %v734, %v748
  %v751 = vmul.f32 %v735, %v749
  %v753 = vlaneseq
  %v754 = vshrl.u32 %v753, 7
  %v755 = vsub.s32 0, %v754
  %v756 = vrot.slane %v724, %v755
  %v758 = vmul.f32 %v750, %v756
  %v759 = vmul.f32 %v751, %v756
  %v761 = vlaneseq
  %v762 = vshrl.u32 %v761, 7
  %v763 = vsub.s32 0, %v762
  %v764 = vrot.slane %v725, %v763
  %v766 = vadd.f32 %v758, %v764
  %v767 = vadd.f32 %v759, %v764
  %v768 = vpack.c.bf16 %v767, %v766
  %v769 = vld [vmem:[%s10] sm:$0xf]
  %v770 = vld [vmem:[%s10 + $0x4] sm:$0xf]
  %v771 = vld [vmem:[%s10 + $0x8] sm:$0xf]
  %v772 = vld [vmem:[%s10 + $0xc] sm:$0xf]
  %v773 = vld [vmem:[%s11] sm:$0x1]
  %v775 = vlaneseq
  %v776 = vshrl.u32 %v775, 7
  %v777 = vsub.s32 0, %v776
  %v778 = vrot.slane %v773, %v777
  %v784 = vunpack.c.l.b16 %v769
  %v785 = vunpack.c.l.b16 %v770
  %v786 = vunpack.c.l.b16 %v771
  %v787 = vunpack.c.l.b16 %v772
  %v788 = vpack.c.b16 %v785, %v784
  %v789 = vpack.c.b16 %v787, %v786
  %v793 = vsel %vm69, %v768, 0
  %795 = vmatprep.subr.bf16.mxu0 0
  %796 = vmatpush1.bf16.msra.mxu0 0
  %797 = vmatprep.subr.bf16.mxu0 0
  %798 = vmatpush1.bf16.msra.mxu0 0
  %799 = vmatprep.subr.bf16.mxu0 0
  %800 = vmatpush1.bf16.msra.mxu0 0
  %801 = vmatprep.subr.bf16.mxu0 0
  %802 = vmatpush1.bf16.msra.mxu0 0
  %803 = vmatprep.subr.bf16.mxu0 0
  %804 = vmatpush1.bf16.msra.mxu0 0
  %805 = vmatprep.subr.bf16.mxu0 0
  %806 = vmatpush1.bf16.msra.mxu0 0
  %807 = vmatprep.subr.bf16.mxu0 0
  %808 = vmatpush1.bf16.msra.mxu0 %v789
  %809 = vmatprep.subr.bf16.mxu0 0
  %810 = vmatpush1.bf16.msra.mxu0 %v788
  %811 = vmatprep.subr.bf16.mxu0 0
  %812 = vmatpush2.bf16.msra.mxu0 0
  %813 = vmatprep.subr.bf16.mxu0 0
  %814 = vmatpush2.bf16.msra.mxu0 0
  %815 = vmatprep.subr.bf16.mxu0 0
  %816 = vmatpush2.bf16.msra.mxu0 0
  %817 = vmatprep.subr.bf16.mxu0 0
  %818 = vmatpush2.bf16.msra.mxu0 0
  %819 = vmatprep.subr.bf16.mxu0 0
  %820 = vmatpush2.bf16.msra.mxu0 0
  %821 = vmatprep.subr.bf16.mxu0 0
  %822 = vmatpush2.bf16.msra.mxu0 0
  %823 = vmatprep.subr.bf16.mxu0 0
  %824 = vmatpush2.bf16.msra.mxu0 0
  %825 = vmatprep.subr.bf16.mxu0 0
  %826 = vmatpush2.bf16.msra.mxu0 0
  %827 = vmatprep.mubr.bf16.mxu0 0
  %828 = vmatmul.mubr.bf16.gmra.mxu0 %v793
  %v829 = vpop.f32.mrf.mxu0
  %v830 = vadd.f32 %v778, %v829
  %v831 = vpop.f32.mrf.mxu0
  %v832 = vpop.f32.mrf.mxu0
  %v833 = vadd.f32 %v778, %v832
  %v834 = vpop.f32.mrf.mxu0
  %835 = vdwg.mxu0
  %v836 = vmul.f32 %v830, %v830
  %v837 = vmul.f32 %v833, %v833
  %v838 = vmul.f32 %v830, %v836
  %v839 = vmul.f32 %v833, %v837
  %v840 = vmul.f32 %v838, 0.044715
  %v841 = vmul.f32 %v839, 0.044715
  %v842 = vadd.f32 %v830, %v840
  %v843 = vadd.f32 %v833, %v841
  %v844 = vmul.f32 %v842, 0.7978846
  %v845 = vmul.f32 %v843, 0.7978846
  %v846 = vtanh.pop %v844
  %v847 = vtanh.pop %v845
  %v848 = vadd.f32 %v846, 1.0
  %v849 = vadd.f32 %v847, 1.0
  %v850 = vmul.f32 %v848, 0.5
  %v851 = vmul.f32 %v849, 0.5
  %v852 = vmul.f32 %v830, %v850
  %v853 = vmul.f32 %v833, %v851
  %v854 = vpack.c.bf16 %v853, %v852
  %v855 = vld [vmem:[%s12] sm:$0xf]
  %v856 = vld [vmem:[%s12 + $0x4] sm:$0xf]
  %v857 = vld [vmem:[%s12 + $0x8] sm:$0xf]
  %v858 = vld [vmem:[%s12 + $0xc] sm:$0xf]
  %v859 = vld [vmem:[%s12 + $0x10] sm:$0xf]
  %v860 = vld [vmem:[%s12 + $0x14] sm:$0xf]
  %v861 = vld [vmem:[%s12 + $0x18] sm:$0xf]
  %v862 = vld [vmem:[%s12 + $0x1c] sm:$0xf]
  %v863 = vld [vmem:[%s13] sm:$0x1]
  %v865 = vlaneseq
  %v866 = vshrl.u32 %v865, 7
  %v867 = vsub.s32 0, %v866
  %v868 = vrot.slane %v863, %v867
  %v878 = vunpack.c.l.b16 %v855
  %v879 = vunpack.c.l.b16 %v856
  %v880 = vunpack.c.l.b16 %v857
  %v881 = vunpack.c.l.b16 %v858
  %v882 = vunpack.c.l.b16 %v859
  %v883 = vunpack.c.l.b16 %v860
  %v884 = vunpack.c.l.b16 %v861
  %v885 = vunpack.c.l.b16 %v862
  %v886 = vpack.c.b16 %v879, %v878
  %v887 = vpack.c.b16 %v881, %v880
  %v888 = vpack.c.b16 %v883, %v882
  %v889 = vpack.c.b16 %v885, %v884
  %vm894 = vcmask 523264
  %v896 = vsel %vm894, %v854, 0
  %898 = vmatprep.subr.bf16.mxu0 0
  %899 = vmatpush1.bf16.msra.mxu0 0
  %900 = vmatprep.subr.bf16.mxu0 0
  %901 = vmatpush1.bf16.msra.mxu0 0
  %902 = vmatprep.subr.bf16.mxu0 0
  %903 = vmatpush1.bf16.msra.mxu0 0
  %904 = vmatprep.subr.bf16.mxu0 0
  %905 = vmatpush1.bf16.msra.mxu0 0
  %906 = vmatprep.subr.bf16.mxu0 0
  %907 = vmatpush1.bf16.msra.mxu0 %v889
  %908 = vmatprep.subr.bf16.mxu0 0
  %909 = vmatpush1.bf16.msra.mxu0 %v888
  %910 = vmatprep.subr.bf16.mxu0 0
  %911 = vmatpush1.bf16.msra.mxu0 %v887
  %912 = vmatprep.subr.bf16.mxu0 0
  %913 = vmatpush1.bf16.msra.mxu0 %v886
  %914 = vmatprep.subr.bf16.mxu0 0
  %915 = vmatpush2.bf16.msra.mxu0 0
  %916 = vmatprep.subr.bf16.mxu0 0
  %917 = vmatpush2.bf16.msra.mxu0 0
  %918 = vmatprep.subr.bf16.mxu0 0
  %919 = vmatpush2.bf16.msra.mxu0 0
  %920 = vmatprep.subr.bf16.mxu0 0
  %921 = vmatpush2.bf16.msra.mxu0 0
  %922 = vmatprep.subr.bf16.mxu0 0
  %923 = vmatpush2.bf16.msra.mxu0 0
  %924 = vmatprep.subr.bf16.mxu0 0
  %925 = vmatpush2.bf16.msra.mxu0 0
  %926 = vmatprep.subr.bf16.mxu0 0
  %927 = vmatpush2.bf16.msra.mxu0 0
  %928 = vmatprep.subr.bf16.mxu0 0
  %929 = vmatpush2.bf16.msra.mxu0 0
  %930 = vmatprep.mubr.bf16.mxu0 0
  %931 = vmatmul.mubr.bf16.gmra.mxu0 %v896
  %v932 = vpop.f32.mrf.mxu0
  %v933 = vadd.f32 %v868, %v932
  %v934 = vpop.f32.mrf.mxu0
  %v935 = vpop.f32.mrf.mxu0
  %v936 = vadd.f32 %v868, %v935
  %v937 = vpop.f32.mrf.mxu0
  %938 = vdwg.mxu0
  %v939 = vadd.f32 %v766, %v933
  %v940 = vadd.f32 %v767, %v936
  %v941 = vld [vmem:[%s14] sm:$0x1]
  %v942 = vld [vmem:[%s15] sm:$0x1]
  %v943 = vsel %vm69, %v939, 0.0
  %944 = vadd.xlane.f32.xlu0 %v943
  %v945 = vpop.xlane.xlu0 %944
  %v946 = vsel %vm69, %v940, 0.0
  %947 = vadd.xlane.f32.xlu0 %v946
  %v948 = vpop.xlane.xlu0 %947
  %v949 = vmul.f32 %v945, %v76
  %v950 = vmul.f32 %v948, %v76
  %v951 = vsub.f32 %v939, %v949
  %v952 = vsub.f32 %v940, %v950
  %v953 = vmul.f32 %v951, %v951
  %v954 = vmul.f32 %v952, %v952
  %v955 = vsel %vm69, %v953, 0.0
  %956 = vadd.xlane.f32.xlu0 %v955
  %v957 = vpop.xlane.xlu0 %956
  %v958 = vsel %vm69, %v954, 0.0
  %959 = vadd.xlane.f32.xlu0 %v958
  %v960 = vpop.xlane.xlu0 %959
  %v961 = vmul.f32 %v957, %v76
  %v962 = vmul.f32 %v960, %v76
  %v963 = vadd.f32 %v961, 1e-12
  %v964 = vadd.f32 %v962, 1e-12
  %v965 = vrsqrt.pop %v963
  %v966 = vrsqrt.pop %v964
  %v967 = vmul.f32 %v951, %v965
  %v968 = vmul.f32 %v952, %v966
  %v970 = vlaneseq
  %v971 = vshrl.u32 %v970, 7
  %v972 = vsub.s32 0, %v971
  %v973 = vrot.slane %v941, %v972
  %v975 = vmul.f32 %v967, %v973
  %v976 = vmul.f32 %v968, %v973
  %v978 = vlaneseq
  %v979 = vshrl.u32 %v978, 7
  %v980 = vsub.s32 0, %v979
  %v981 = vrot.slane %v942, %v980
  %v983 = vadd.f32 %v975, %v981
  %v984 = vadd.f32 %v976, %v981
  %v985 = vpack.c.bf16 %v984, %v983
  %s986 = scalar_lea.vmem %s4, 16
  %v987 = vld [vmem:[%s986] sm:$0xf]
  %v988 = vld [vmem:[%s986 + $0x4] sm:$0xf]
  %v989 = vld [vmem:[%s986 + $0x8] sm:$0xf]
  %v990 = vld [vmem:[%s986 + $0xc] sm:$0xf]
  %s991 = scalar_lea.vmem %s5, 1
  %v992 = vld [vmem:[%s991] sm:$0x1]
  %v994 = vlaneseq
  %v995 = vshrl.u32 %v994, 7
  %v996 = vsub.s32 0, %v995
  %v997 = vrot.slane %v992, %v996
  %v1003 = vunpack.c.l.b16 %v987
  %v1004 = vunpack.c.l.b16 %v988
  %v1005 = vunpack.c.l.b16 %v989
  %v1006 = vunpack.c.l.b16 %v990
  %v1007 = vpack.c.b16 %v1004, %v1003
  %v1008 = vpack.c.b16 %v1006, %v1005
  %v1012 = vsel %vm69, %v985, 0
  %1014 = vmatprep.subr.bf16.mxu0 0
  %1015 = vmatpush1.bf16.msra.mxu0 0
  %1016 = vmatprep.subr.bf16.mxu0 0
  %1017 = vmatpush1.bf16.msra.mxu0 0
  %1018 = vmatprep.subr.bf16.mxu0 0
  %1019 = vmatpush1.bf16.msra.mxu0 0
  %1020 = vmatprep.subr.bf16.mxu0 0
  %1021 = vmatpush1.bf16.msra.mxu0 0
  %1022 = vmatprep.subr.bf16.mxu0 0
  %1023 = vmatpush1.bf16.msra.mxu0 0
  %1024 = vmatprep.subr.bf16.mxu0 0
  %1025 = vmatpush1.bf16.msra.mxu0 0
  %1026 = vmatprep.subr.bf16.mxu0 0
  %1027 = vmatpush1.bf16.msra.mxu0 %v1008
  %1028 = vmatprep.subr.bf16.mxu0 0
  %1029 = vmatpush1.bf16.msra.mxu0 %v1007
  %1030 = vmatprep.subr.bf16.mxu0 0
  %1031 = vmatpush2.bf16.msra.mxu0 0
  %1032 = vmatprep.subr.bf16.mxu0 0
  %1033 = vmatpush2.bf16.msra.mxu0 0
  %1034 = vmatprep.subr.bf16.mxu0 0
  %1035 = vmatpush2.bf16.msra.mxu0 0
  %1036 = vmatprep.subr.bf16.mxu0 0
  %1037 = vmatpush2.bf16.msra.mxu0 0
  %1038 = vmatprep.subr.bf16.mxu0 0
  %1039 = vmatpush2.bf16.msra.mxu0 0
  %1040 = vmatprep.subr.bf16.mxu0 0
  %1041 = vmatpush2.bf16.msra.mxu0 0
  %1042 = vmatprep.subr.bf16.mxu0 0
  %1043 = vmatpush2.bf16.msra.mxu0 0
  %1044 = vmatprep.subr.bf16.mxu0 0
  %1045 = vmatpush2.bf16.msra.mxu0 0
  %1046 = vmatprep.mubr.bf16.mxu0 0
  %1047 = vmatmul.mubr.bf16.gmra.mxu0 %v1012
  %v1048 = vpop.f32.mrf.mxu0
  %v1049 = vadd.f32 %v997, %v1048
  %v1050 = vpop.f32.mrf.mxu0
  %v1051 = vpop.f32.mrf.mxu0
  %v1052 = vadd.f32 %v997, %v1051
  %v1053 = vpop.f32.mrf.mxu0
  %1054 = vdwg.mxu0
  %v1055 = vpack.c.bf16 %v1049, %v1049
  %v1056 = vpack.c.bf16 %v1052, %v1052
  %1058 = vrot.lane.b32.xlu0 %v1055, 96
  %v1059 = vpop.permute.xlu0 %1058
  %v1061 = vsel %vm186, %v1055, 0
  %v1064 = vsel %vm186, %v1059, 0
  %1066 = vmatprep.subr.bf16.mxu0 0
  %1067 = vmatpush1.bf16.xpose.msra.mxu0 0
  %1068 = vmatprep.subr.bf16.mxu0 0
  %1069 = vmatpush1.bf16.xpose.msra.mxu0 0
  %1070 = vmatprep.subr.bf16.mxu0 0
  %1071 = vmatpush1.bf16.xpose.msra.mxu0 0
  %1072 = vmatprep.subr.bf16.mxu0 0
  %1073 = vmatpush1.bf16.xpose.msra.mxu0 0
  %1074 = vmatprep.subr.bf16.mxu0 0
  %1075 = vmatpush1.bf16.xpose.msra.mxu0 0
  %1076 = vmatprep.subr.bf16.mxu0 0
  %1077 = vmatpush1.bf16.xpose.msra.mxu0 0
  %1078 = vmatprep.subr.bf16.mxu0 0
  %1079 = vmatpush1.bf16.xpose.msra.mxu0 0
  %1080 = vmatprep.subr.bf16.mxu0 0
  %1081 = vmatpush1.bf16.xpose.msra.mxu0 %v1064
  %1082 = vmatprep.subr.bf16.mxu0 0
  %1083 = vmatpush2.bf16.xpose.msra.mxu0 0
  %1084 = vmatprep.subr.bf16.mxu0 0
  %1085 = vmatpush2.bf16.xpose.msra.mxu0 0
  %1086 = vmatprep.subr.bf16.mxu0 0
  %1087 = vmatpush2.bf16.xpose.msra.mxu0 0
  %1088 = vmatprep.subr.bf16.mxu0 0
  %1089 = vmatpush2.bf16.xpose.msra.mxu0 0
  %1090 = vmatprep.subr.bf16.mxu0 0
  %1091 = vmatpush2.bf16.xpose.msra.mxu0 0
  %1092 = vmatprep.subr.bf16.mxu0 0
  %1093 = vmatpush2.bf16.xpose.msra.mxu0 0
  %1094 = vmatprep.subr.bf16.mxu0 0
  %1095 = vmatpush2.bf16.xpose.msra.mxu0 0
  %1096 = vmatprep.subr.bf16.mxu0 0
  %1097 = vmatpush2.bf16.xpose.msra.mxu0 0
  %1098 = vmatprep.mubr.bf16.mxu0 0
  %1099 = vmatmul.mubr.bf16.gmra.mxu0 %v1061
  %v1100 = vpop.f32.mrf.mxu0
  %v1101 = vadd.f32 0.0, %v1100
  %v1102 = vpop.f32.mrf.mxu0
  %v1103 = vpop.f32.mrf.mxu0
  %v1104 = vpop.f32.mrf.mxu0
  %1105 = vdwg.mxu0
  %1107 = vrot.lane.b32.xlu0 %v1056, 96
  %v1108 = vpop.permute.xlu0 %1107
  %v1110 = vsel %vm186, %v1056, 0
  %v1113 = vsel %vm186, %v1108, 0
  %1115 = vmatprep.subr.bf16.mxu0 0
  %1116 = vmatpush1.bf16.xpose.msra.mxu0 0
  %1117 = vmatprep.subr.bf16.mxu0 0
  %1118 = vmatpush1.bf16.xpose.msra.mxu0 0
  %1119 = vmatprep.subr.bf16.mxu0 0
  %1120 = vmatpush1.bf16.xpose.msra.mxu0 0
  %1121 = vmatprep.subr.bf16.mxu0 0
  %1122 = vmatpush1.bf16.xpose.msra.mxu0 0
  %1123 = vmatprep.subr.bf16.mxu0 0
  %1124 = vmatpush1.bf16.xpose.msra.mxu0 0
  %1125 = vmatprep.subr.bf16.mxu0 0
  %1126 = vmatpush1.bf16.xpose.msra.mxu0 0
  %1127 = vmatprep.subr.bf16.mxu0 0
  %1128 = vmatpush1.bf16.xpose.msra.mxu0 0
  %1129 = vmatprep.subr.bf16.mxu0 0
  %1130 = vmatpush1.bf16.xpose.msra.mxu0 %v1113
  %1131 = vmatprep.subr.bf16.mxu0 0
  %1132 = vmatpush2.bf16.xpose.msra.mxu0 0
  %1133 = vmatprep.subr.bf16.mxu0 0
  %1134 = vmatpush2.bf16.xpose.msra.mxu0 0
  %1135 = vmatprep.subr.bf16.mxu0 0
  %1136 = vmatpush2.bf16.xpose.msra.mxu0 0
  %1137 = vmatprep.subr.bf16.mxu0 0
  %1138 = vmatpush2.bf16.xpose.msra.mxu0 0
  %1139 = vmatprep.subr.bf16.mxu0 0
  %1140 = vmatpush2.bf16.xpose.msra.mxu0 0
  %1141 = vmatprep.subr.bf16.mxu0 0
  %1142 = vmatpush2.bf16.xpose.msra.mxu0 0
  %1143 = vmatprep.subr.bf16.mxu0 0
  %1144 = vmatpush2.bf16.xpose.msra.mxu0 0
  %1145 = vmatprep.subr.bf16.mxu0 0
  %1146 = vmatpush2.bf16.xpose.msra.mxu0 0
  %1147 = vmatprep.mubr.bf16.mxu0 0
  %1148 = vmatmul.mubr.bf16.gmra.mxu0 %v1110
  %v1149 = vpop.f32.mrf.mxu0
  %v1150 = vadd.f32 0.0, %v1149
  %v1151 = vpop.f32.mrf.mxu0
  %v1152 = vpop.f32.mrf.mxu0
  %v1153 = vpop.f32.mrf.mxu0
  %1154 = vdwg.mxu0
  %v1155 = vmul.f32 %v1101, 0.25
  %v1156 = vmul.f32 %v1150, 0.25
  %v1157 = vadd.f32 %v1155, %v289
  %v1158 = vadd.f32 %v1156, %v293
  %v1159 = vsel %vm298, %v1157, -inf
  %1160 = vmax.xlane.f32.xlu0 %v1159
  %v1161 = vpop.xlane.xlu0 %1160
  %v1162 = vsel %vm298, %v1158, -inf
  %1163 = vmax.xlane.f32.xlu0 %v1162
  %v1164 = vpop.xlane.xlu0 %1163
  %v1165 = vsub.f32 %v1157, %v1161
  %v1166 = vsub.f32 %v1158, %v1164
  %v1167 = vmul.f32 %v1165, 1.442695
  %v1168 = vpow.pop %v1167
  %v1169 = vmul.f32 %v1166, 1.442695
  %v1170 = vpow.pop %v1169
  %v1171 = vsel %vm298, %v1168, 0.0
  %1172 = vadd.xlane.f32.xlu0 %v1171
  %v1173 = vpop.xlane.xlu0 %1172
  %v1174 = vsel %vm298, %v1170, 0.0
  %1175 = vadd.xlane.f32.xlu0 %v1174
  %v1176 = vpop.xlane.xlu0 %1175
  %v1177 = vrcp.pop %v1173
  %v1178 = vrcp.pop %v1176
  %v1179 = vmul.f32 %v1168, %v1177
  %v1180 = vmul.f32 %v1170, %v1178
  %v1181 = vpack.c.bf16 %v1179, %v1179
  %v1182 = vpack.c.bf16 %v1180, %v1180
  %1183 = vrot.lane.b32.xlu0 %v1055, 64
  %v1184 = vpop.permute.xlu0 %1183
  %v1186 = vsel %vm298, %v1181, 0
  %v1189 = vsel %vm328, %v1184, 0
  %1191 = vmatprep.subr.bf16.mxu0 0
  %1192 = vmatpush1.bf16.msra.mxu0 0
  %1193 = vmatprep.subr.bf16.mxu0 0
  %1194 = vmatpush1.bf16.msra.mxu0 0
  %1195 = vmatprep.subr.bf16.mxu0 0
  %1196 = vmatpush1.bf16.msra.mxu0 0
  %1197 = vmatprep.subr.bf16.mxu0 0
  %1198 = vmatpush1.bf16.msra.mxu0 0
  %1199 = vmatprep.subr.bf16.mxu0 0
  %1200 = vmatpush1.bf16.msra.mxu0 0
  %1201 = vmatprep.subr.bf16.mxu0 0
  %1202 = vmatpush1.bf16.msra.mxu0 0
  %1203 = vmatprep.subr.bf16.mxu0 0
  %1204 = vmatpush1.bf16.msra.mxu0 0
  %1205 = vmatprep.subr.bf16.mxu0 0
  %1206 = vmatpush1.bf16.msra.mxu0 %v1189
  %1207 = vmatprep.subr.bf16.mxu0 0
  %1208 = vmatpush2.bf16.msra.mxu0 0
  %1209 = vmatprep.subr.bf16.mxu0 0
  %1210 = vmatpush2.bf16.msra.mxu0 0
  %1211 = vmatprep.subr.bf16.mxu0 0
  %1212 = vmatpush2.bf16.msra.mxu0 0
  %1213 = vmatprep.subr.bf16.mxu0 0
  %1214 = vmatpush2.bf16.msra.mxu0 0
  %1215 = vmatprep.subr.bf16.mxu0 0
  %1216 = vmatpush2.bf16.msra.mxu0 0
  %1217 = vmatprep.subr.bf16.mxu0 0
  %1218 = vmatpush2.bf16.msra.mxu0 0
  %1219 = vmatprep.subr.bf16.mxu0 0
  %1220 = vmatpush2.bf16.msra.mxu0 0
  %1221 = vmatprep.subr.bf16.mxu0 0
  %1222 = vmatpush2.bf16.msra.mxu0 0
  %1223 = vmatprep.mubr.bf16.mxu0 0
  %1224 = vmatmul.mubr.bf16.gmra.mxu0 %v1186
  %v1225 = vpop.f32.mrf.mxu0
  %v1226 = vadd.f32 0.0, %v1225
  %v1227 = vpop.f32.mrf.mxu0
  %v1228 = vpop.f32.mrf.mxu0
  %v1229 = vpop.f32.mrf.mxu0
  %1230 = vdwg.mxu0
  %1231 = vrot.lane.b32.xlu0 %v1056, 64
  %v1232 = vpop.permute.xlu0 %1231
  %v1234 = vsel %vm298, %v1182, 0
  %v1237 = vsel %vm328, %v1232, 0
  %1239 = vmatprep.subr.bf16.mxu0 0
  %1240 = vmatpush1.bf16.msra.mxu0 0
  %1241 = vmatprep.subr.bf16.mxu0 0
  %1242 = vmatpush1.bf16.msra.mxu0 0
  %1243 = vmatprep.subr.bf16.mxu0 0
  %1244 = vmatpush1.bf16.msra.mxu0 0
  %1245 = vmatprep.subr.bf16.mxu0 0
  %1246 = vmatpush1.bf16.msra.mxu0 0
  %1247 = vmatprep.subr.bf16.mxu0 0
  %1248 = vmatpush1.bf16.msra.mxu0 0
  %1249 = vmatprep.subr.bf16.mxu0 0
  %1250 = vmatpush1.bf16.msra.mxu0 0
  %1251 = vmatprep.subr.bf16.mxu0 0
  %1252 = vmatpush1.bf16.msra.mxu0 0
  %1253 = vmatprep.subr.bf16.mxu0 0
  %1254 = vmatpush1.bf16.msra.mxu0 %v1237
  %1255 = vmatprep.subr.bf16.mxu0 0
  %1256 = vmatpush2.bf16.msra.mxu0 0
  %1257 = vmatprep.subr.bf16.mxu0 0
  %1258 = vmatpush2.bf16.msra.mxu0 0
  %1259 = vmatprep.subr.bf16.mxu0 0
  %1260 = vmatpush2.bf16.msra.mxu0 0
  %1261 = vmatprep.subr.bf16.mxu0 0
  %1262 = vmatpush2.bf16.msra.mxu0 0
  %1263 = vmatprep.subr.bf16.mxu0 0
  %1264 = vmatpush2.bf16.msra.mxu0 0
  %1265 = vmatprep.subr.bf16.mxu0 0
  %1266 = vmatpush2.bf16.msra.mxu0 0
  %1267 = vmatprep.subr.bf16.mxu0 0
  %1268 = vmatpush2.bf16.msra.mxu0 0
  %1269 = vmatprep.subr.bf16.mxu0 0
  %1270 = vmatpush2.bf16.msra.mxu0 0
  %1271 = vmatprep.mubr.bf16.mxu0 0
  %1272 = vmatmul.mubr.bf16.gmra.mxu0 %v1234
  %v1273 = vpop.f32.mrf.mxu0
  %v1274 = vadd.f32 0.0, %v1273
  %v1275 = vpop.f32.mrf.mxu0
  %v1276 = vpop.f32.mrf.mxu0
  %v1277 = vpop.f32.mrf.mxu0
  %1278 = vdwg.mxu0
  %1279 = vrot.lane.b32.xlu0 %v1055, 112
  %v1280 = vpop.permute.xlu0 %1279
  %1281 = vrot.lane.b32.xlu0 %v1055, 80
  %v1282 = vpop.permute.xlu0 %1281
  %v1284 = vsel %vm186, %v1280, 0
  %v1287 = vsel %vm186, %v1282, 0
  %1289 = vmatprep.subr.bf16.mxu0 0
  %1290 = vmatpush1.bf16.xpose.msra.mxu0 0
  %1291 = vmatprep.subr.bf16.mxu0 0
  %1292 = vmatpush1.bf16.xpose.msra.mxu0 0
  %1293 = vmatprep.subr.bf16.mxu0 0
  %1294 = vmatpush1.bf16.xpose.msra.mxu0 0
  %1295 = vmatprep.subr.bf16.mxu0 0
  %1296 = vmatpush1.bf16.xpose.msra.mxu0 0
  %1297 = vmatprep.subr.bf16.mxu0 0
  %1298 = vmatpush1.bf16.xpose.msra.mxu0 0
  %1299 = vmatprep.subr.bf16.mxu0 0
  %1300 = vmatpush1.bf16.xpose.msra.mxu0 0
  %1301 = vmatprep.subr.bf16.mxu0 0
  %1302 = vmatpush1.bf16.xpose.msra.mxu0 0
  %1303 = vmatprep.subr.bf16.mxu0 0
  %1304 = vmatpush1.bf16.xpose.msra.mxu0 %v1287
  %1305 = vmatprep.subr.bf16.mxu0 0
  %1306 = vmatpush2.bf16.xpose.msra.mxu0 0
  %1307 = vmatprep.subr.bf16.mxu0 0
  %1308 = vmatpush2.bf16.xpose.msra.mxu0 0
  %1309 = vmatprep.subr.bf16.mxu0 0
  %1310 = vmatpush2.bf16.xpose.msra.mxu0 0
  %1311 = vmatprep.subr.bf16.mxu0 0
  %1312 = vmatpush2.bf16.xpose.msra.mxu0 0
  %1313 = vmatprep.subr.bf16.mxu0 0
  %1314 = vmatpush2.bf16.xpose.msra.mxu0 0
  %1315 = vmatprep.subr.bf16.mxu0 0
  %1316 = vmatpush2.bf16.xpose.msra.mxu0 0
  %1317 = vmatprep.subr.bf16.mxu0 0
  %1318 = vmatpush2.bf16.xpose.msra.mxu0 0
  %1319 = vmatprep.subr.bf16.mxu0 0
  %1320 = vmatpush2.bf16.xpose.msra.mxu0 0
  %1321 = vmatprep.mubr.bf16.mxu0 0
  %1322 = vmatmul.mubr.bf16.gmra.mxu0 %v1284
  %v1323 = vpop.f32.mrf.mxu0
  %v1324 = vadd.f32 0.0, %v1323
  %v1325 = vpop.f32.mrf.mxu0
  %v1326 = vpop.f32.mrf.mxu0
  %v1327 = vpop.f32.mrf.mxu0
  %1328 = vdwg.mxu0
  %1329 = vrot.lane.b32.xlu0 %v1056, 112
  %v1330 = vpop.permute.xlu0 %1329
  %1331 = vrot.lane.b32.xlu0 %v1056, 80
  %v1332 = vpop.permute.xlu0 %1331
  %v1334 = vsel %vm186, %v1330, 0
  %v1337 = vsel %vm186, %v1332, 0
  %1339 = vmatprep.subr.bf16.mxu0 0
  %1340 = vmatpush1.bf16.xpose.msra.mxu0 0
  %1341 = vmatprep.subr.bf16.mxu0 0
  %1342 = vmatpush1.bf16.xpose.msra.mxu0 0
  %1343 = vmatprep.subr.bf16.mxu0 0
  %1344 = vmatpush1.bf16.xpose.msra.mxu0 0
  %1345 = vmatprep.subr.bf16.mxu0 0
  %1346 = vmatpush1.bf16.xpose.msra.mxu0 0
  %1347 = vmatprep.subr.bf16.mxu0 0
  %1348 = vmatpush1.bf16.xpose.msra.mxu0 0
  %1349 = vmatprep.subr.bf16.mxu0 0
  %1350 = vmatpush1.bf16.xpose.msra.mxu0 0
  %1351 = vmatprep.subr.bf16.mxu0 0
  %1352 = vmatpush1.bf16.xpose.msra.mxu0 0
  %1353 = vmatprep.subr.bf16.mxu0 0
  %1354 = vmatpush1.bf16.xpose.msra.mxu0 %v1337
  %1355 = vmatprep.subr.bf16.mxu0 0
  %1356 = vmatpush2.bf16.xpose.msra.mxu0 0
  %1357 = vmatprep.subr.bf16.mxu0 0
  %1358 = vmatpush2.bf16.xpose.msra.mxu0 0
  %1359 = vmatprep.subr.bf16.mxu0 0
  %1360 = vmatpush2.bf16.xpose.msra.mxu0 0
  %1361 = vmatprep.subr.bf16.mxu0 0
  %1362 = vmatpush2.bf16.xpose.msra.mxu0 0
  %1363 = vmatprep.subr.bf16.mxu0 0
  %1364 = vmatpush2.bf16.xpose.msra.mxu0 0
  %1365 = vmatprep.subr.bf16.mxu0 0
  %1366 = vmatpush2.bf16.xpose.msra.mxu0 0
  %1367 = vmatprep.subr.bf16.mxu0 0
  %1368 = vmatpush2.bf16.xpose.msra.mxu0 0
  %1369 = vmatprep.subr.bf16.mxu0 0
  %1370 = vmatpush2.bf16.xpose.msra.mxu0 0
  %1371 = vmatprep.mubr.bf16.mxu0 0
  %1372 = vmatmul.mubr.bf16.gmra.mxu0 %v1334
  %v1373 = vpop.f32.mrf.mxu0
  %v1374 = vadd.f32 0.0, %v1373
  %v1375 = vpop.f32.mrf.mxu0
  %v1376 = vpop.f32.mrf.mxu0
  %v1377 = vpop.f32.mrf.mxu0
  %1378 = vdwg.mxu0
  %v1379 = vmul.f32 %v1324, 0.25
  %v1380 = vmul.f32 %v1374, 0.25
  %v1381 = vadd.f32 %v1379, %v289
  %v1382 = vadd.f32 %v1380, %v293
  %v1383 = vsel %vm298, %v1381, -inf
  %1384 = vmax.xlane.f32.xlu0 %v1383
  %v1385 = vpop.xlane.xlu0 %1384
  %v1386 = vsel %vm298, %v1382, -inf
  %1387 = vmax.xlane.f32.xlu0 %v1386
  %v1388 = vpop.xlane.xlu0 %1387
  %v1389 = vsub.f32 %v1381, %v1385
  %v1390 = vsub.f32 %v1382, %v1388
  %v1391 = vmul.f32 %v1389, 1.442695
  %v1392 = vpow.pop %v1391
  %v1393 = vmul.f32 %v1390, 1.442695
  %v1394 = vpow.pop %v1393
  %v1395 = vsel %vm298, %v1392, 0.0
  %1396 = vadd.xlane.f32.xlu0 %v1395
  %v1397 = vpop.xlane.xlu0 %1396
  %v1398 = vsel %vm298, %v1394, 0.0
  %1399 = vadd.xlane.f32.xlu0 %v1398
  %v1400 = vpop.xlane.xlu0 %1399
  %v1401 = vrcp.pop %v1397
  %v1402 = vrcp.pop %v1400
  %v1403 = vmul.f32 %v1392, %v1401
  %v1404 = vmul.f32 %v1394, %v1402
  %v1405 = vpack.c.bf16 %v1403, %v1403
  %v1406 = vpack.c.bf16 %v1404, %v1404
  %1407 = vrot.lane.b32.xlu0 %v1055, 48
  %v1408 = vpop.permute.xlu0 %1407
  %v1410 = vsel %vm298, %v1405, 0
  %v1413 = vsel %vm328, %v1408, 0
  %1415 = vmatprep.subr.bf16.mxu0 0
  %1416 = vmatpush1.bf16.msra.mxu0 0
  %1417 = vmatprep.subr.bf16.mxu0 0
  %1418 = vmatpush1.bf16.msra.mxu0 0
  %1419 = vmatprep.subr.bf16.mxu0 0
  %1420 = vmatpush1.bf16.msra.mxu0 0
  %1421 = vmatprep.subr.bf16.mxu0 0
  %1422 = vmatpush1.bf16.msra.mxu0 0
  %1423 = vmatprep.subr.bf16.mxu0 0
  %1424 = vmatpush1.bf16.msra.mxu0 0
  %1425 = vmatprep.subr.bf16.mxu0 0
  %1426 = vmatpush1.bf16.msra.mxu0 0
  %1427 = vmatprep.subr.bf16.mxu0 0
  %1428 = vmatpush1.bf16.msra.mxu0 0
  %1429 = vmatprep.subr.bf16.mxu0 0
  %1430 = vmatpush1.bf16.msra.mxu0 %v1413
  %1431 = vmatprep.subr.bf16.mxu0 0
  %1432 = vmatpush2.bf16.msra.mxu0 0
  %1433 = vmatprep.subr.bf16.mxu0 0
  %1434 = vmatpush2.bf16.msra.mxu0 0
  %1435 = vmatprep.subr.bf16.mxu0 0
  %1436 = vmatpush2.bf16.msra.mxu0 0
  %1437 = vmatprep.subr.bf16.mxu0 0
  %1438 = vmatpush2.bf16.msra.mxu0 0
  %1439 = vmatprep.subr.bf16.mxu0 0
  %1440 = vmatpush2.bf16.msra.mxu0 0
  %1441 = vmatprep.subr.bf16.mxu0 0
  %1442 = vmatpush2.bf16.msra.mxu0 0
  %1443 = vmatprep.subr.bf16.mxu0 0
  %1444 = vmatpush2.bf16.msra.mxu0 0
  %1445 = vmatprep.subr.bf16.mxu0 0
  %1446 = vmatpush2.bf16.msra.mxu0 0
  %1447 = vmatprep.mubr.bf16.mxu0 0
  %1448 = vmatmul.mubr.bf16.gmra.mxu0 %v1410
  %v1449 = vpop.f32.mrf.mxu0
  %v1450 = vadd.f32 0.0, %v1449
  %v1451 = vpop.f32.mrf.mxu0
  %v1452 = vpop.f32.mrf.mxu0
  %v1453 = vpop.f32.mrf.mxu0
  %1454 = vdwg.mxu0
  %1455 = vrot.lane.b32.xlu0 %v1056, 48
  %v1456 = vpop.permute.xlu0 %1455
  %v1458 = vsel %vm298, %v1406, 0
  %v1461 = vsel %vm328, %v1456, 0
  %1463 = vmatprep.subr.bf16.mxu0 0
  %1464 = vmatpush1.bf16.msra.mxu0 0
  %1465 = vmatprep.subr.bf16.mxu0 0
  %1466 = vmatpush1.bf16.msra.mxu0 0
  %1467 = vmatprep.subr.bf16.mxu0 0
  %1468 = vmatpush1.bf16.msra.mxu0 0
  %1469 = vmatprep.subr.bf16.mxu0 0
  %1470 = vmatpush1.bf16.msra.mxu0 0
  %1471 = vmatprep.subr.bf16.mxu0 0
  %1472 = vmatpush1.bf16.msra.mxu0 0
  %1473 = vmatprep.subr.bf16.mxu0 0
  %1474 = vmatpush1.bf16.msra.mxu0 0
  %1475 = vmatprep.subr.bf16.mxu0 0
  %1476 = vmatpush1.bf16.msra.mxu0 0
  %1477 = vmatprep.subr.bf16.mxu0 0
  %1478 = vmatpush1.bf16.msra.mxu0 %v1461
  %1479 = vmatprep.subr.bf16.mxu0 0
  %1480 = vmatpush2.bf16.msra.mxu0 0
  %1481 = vmatprep.subr.bf16.mxu0 0
  %1482 = vmatpush2.bf16.msra.mxu0 0
  %1483 = vmatprep.subr.bf16.mxu0 0
  %1484 = vmatpush2.bf16.msra.mxu0 0
  %1485 = vmatprep.subr.bf16.mxu0 0
  %1486 = vmatpush2.bf16.msra.mxu0 0
  %1487 = vmatprep.subr.bf16.mxu0 0
  %1488 = vmatpush2.bf16.msra.mxu0 0
  %1489 = vmatprep.subr.bf16.mxu0 0
  %1490 = vmatpush2.bf16.msra.mxu0 0
  %1491 = vmatprep.subr.bf16.mxu0 0
  %1492 = vmatpush2.bf16.msra.mxu0 0
  %1493 = vmatprep.subr.bf16.mxu0 0
  %1494 = vmatpush2.bf16.msra.mxu0 0
  %1495 = vmatprep.mubr.bf16.mxu0 0
  %1496 = vmatmul.mubr.bf16.gmra.mxu0 %v1458
  %v1497 = vpop.f32.mrf.mxu0
  %v1498 = vadd.f32 0.0, %v1497
  %v1499 = vpop.f32.mrf.mxu0
  %v1500 = vpop.f32.mrf.mxu0
  %v1501 = vpop.f32.mrf.mxu0
  %1502 = vdwg.mxu0
  %1505 = vrot.lane.b32.xlu0 %v1450, 16
  %v1506 = vpop.permute.xlu0 %1505
  %1507 = vrot.lane.b32.xlu0 %v1498, 16
  %v1508 = vpop.permute.xlu0 %1507
  %v1511 = vsel %vm186, %v1226, %v1506
  %v1512 = vsel %vm186, %v1274, %v1508
  %v1513 = vpack.c.bf16 %v1512, %v1511
  %s1514 = scalar_lea.vmem %s6, 16
  %v1515 = vld [vmem:[%s1514] sm:$0xf]
  %v1516 = vld [vmem:[%s1514 + $0x4] sm:$0xf]
  %v1517 = vld [vmem:[%s1514 + $0x8] sm:$0xf]
  %v1518 = vld [vmem:[%s1514 + $0xc] sm:$0xf]
  %s1519 = scalar_lea.vmem %s7, 1
  %v1520 = vld [vmem:[%s1519] sm:$0x1]
  %v1522 = vlaneseq
  %v1523 = vshrl.u32 %v1522, 7
  %v1524 = vsub.s32 0, %v1523
  %v1525 = vrot.slane %v1520, %v1524
  %v1531 = vunpack.c.l.b16 %v1515
  %v1532 = vunpack.c.l.b16 %v1516
  %v1533 = vunpack.c.l.b16 %v1517
  %v1534 = vunpack.c.l.b16 %v1518
  %v1535 = vpack.c.b16 %v1532, %v1531
  %v1536 = vpack.c.b16 %v1534, %v1533
  %v1540 = vsel %vm69, %v1513, 0
  %1542 = vmatprep.subr.bf16.mxu0 0
  %1543 = vmatpush1.bf16.msra.mxu0 0
  %1544 = vmatprep.subr.bf16.mxu0 0
  %1545 = vmatpush1.bf16.msra.mxu0 0
  %1546 = vmatprep.subr.bf16.mxu0 0
  %1547 = vmatpush1.bf16.msra.mxu0 0
  %1548 = vmatprep.subr.bf16.mxu0 0
  %1549 = vmatpush1.bf16.msra.mxu0 0
  %1550 = vmatprep.subr.bf16.mxu0 0
  %1551 = vmatpush1.bf16.msra.mxu0 0
  %1552 = vmatprep.subr.bf16.mxu0 0
  %1553 = vmatpush1.bf16.msra.mxu0 0
  %1554 = vmatprep.subr.bf16.mxu0 0
  %1555 = vmatpush1.bf16.msra.mxu0 %v1536
  %1556 = vmatprep.subr.bf16.mxu0 0
  %1557 = vmatpush1.bf16.msra.mxu0 %v1535
  %1558 = vmatprep.subr.bf16.mxu0 0
  %1559 = vmatpush2.bf16.msra.mxu0 0
  %1560 = vmatprep.subr.bf16.mxu0 0
  %1561 = vmatpush2.bf16.msra.mxu0 0
  %1562 = vmatprep.subr.bf16.mxu0 0
  %1563 = vmatpush2.bf16.msra.mxu0 0
  %1564 = vmatprep.subr.bf16.mxu0 0
  %1565 = vmatpush2.bf16.msra.mxu0 0
  %1566 = vmatprep.subr.bf16.mxu0 0
  %1567 = vmatpush2.bf16.msra.mxu0 0
  %1568 = vmatprep.subr.bf16.mxu0 0
  %1569 = vmatpush2.bf16.msra.mxu0 0
  %1570 = vmatprep.subr.bf16.mxu0 0
  %1571 = vmatpush2.bf16.msra.mxu0 0
  %1572 = vmatprep.subr.bf16.mxu0 0
  %1573 = vmatpush2.bf16.msra.mxu0 0
  %1574 = vmatprep.mubr.bf16.mxu0 0
  %1575 = vmatmul.mubr.bf16.gmra.mxu0 %v1540
  %v1576 = vpop.f32.mrf.mxu0
  %v1577 = vadd.f32 %v1525, %v1576
  %v1578 = vpop.f32.mrf.mxu0
  %v1579 = vpop.f32.mrf.mxu0
  %v1580 = vadd.f32 %v1525, %v1579
  %v1581 = vpop.f32.mrf.mxu0
  %1582 = vdwg.mxu0
  %v1583 = vadd.f32 %v983, %v1577
  %v1584 = vadd.f32 %v984, %v1580
  %s1585 = scalar_lea.vmem %s8, 1
  %v1586 = vld [vmem:[%s1585] sm:$0x1]
  %s1587 = scalar_lea.vmem %s9, 1
  %v1588 = vld [vmem:[%s1587] sm:$0x1]
  %v1589 = vsel %vm69, %v1583, 0.0
  %1590 = vadd.xlane.f32.xlu0 %v1589
  %v1591 = vpop.xlane.xlu0 %1590
  %v1592 = vsel %vm69, %v1584, 0.0
  %1593 = vadd.xlane.f32.xlu0 %v1592
  %v1594 = vpop.xlane.xlu0 %1593
  %v1595 = vmul.f32 %v1591, %v76
  %v1596 = vmul.f32 %v1594, %v76
  %v1597 = vsub.f32 %v1583, %v1595
  %v1598 = vsub.f32 %v1584, %v1596
  %v1599 = vmul.f32 %v1597, %v1597
  %v1600 = vmul.f32 %v1598, %v1598
  %v1601 = vsel %vm69, %v1599, 0.0
  %1602 = vadd.xlane.f32.xlu0 %v1601
  %v1603 = vpop.xlane.xlu0 %1602
  %v1604 = vsel %vm69, %v1600, 0.0
  %1605 = vadd.xlane.f32.xlu0 %v1604
  %v1606 = vpop.xlane.xlu0 %1605
  %v1607 = vmul.f32 %v1603, %v76
  %v1608 = vmul.f32 %v1606, %v76
  %v1609 = vadd.f32 %v1607, 1e-12
  %v1610 = vadd.f32 %v1608, 1e-12
  %v1611 = vrsqrt.pop %v1609
  %v1612 = vrsqrt.pop %v1610
  %v1613 = vmul.f32 %v1597, %v1611
  %v1614 = vmul.f32 %v1598, %v1612
  %v1616 = vlaneseq
  %v1617 = vshrl.u32 %v1616, 7
  %v1618 = vsub.s32 0, %v1617
  %v1619 = vrot.slane %v1586, %v1618
  %v1621 = vmul.f32 %v1613, %v1619
  %v1622 = vmul.f32 %v1614, %v1619
  %v1624 = vlaneseq
  %v1625 = vshrl.u32 %v1624, 7
  %v1626 = vsub.s32 0, %v1625
  %v1627 = vrot.slane %v1588, %v1626
  %v1629 = vadd.f32 %v1621, %v1627
  %v1630 = vadd.f32 %v1622, %v1627
  %v1631 = vpack.c.bf16 %v1630, %v1629
  %s1632 = scalar_lea.vmem %s10, 16
  %v1633 = vld [vmem:[%s1632] sm:$0xf]
  %v1634 = vld [vmem:[%s1632 + $0x4] sm:$0xf]
  %v1635 = vld [vmem:[%s1632 + $0x8] sm:$0xf]
  %v1636 = vld [vmem:[%s1632 + $0xc] sm:$0xf]
  %s1637 = scalar_lea.vmem %s11, 1
  %v1638 = vld [vmem:[%s1637] sm:$0x1]
  %v1640 = vlaneseq
  %v1641 = vshrl.u32 %v1640, 7
  %v1642 = vsub.s32 0, %v1641
  %v1643 = vrot.slane %v1638, %v1642
  %v1649 = vunpack.c.l.b16 %v1633
  %v1650 = vunpack.c.l.b16 %v1634
  %v1651 = vunpack.c.l.b16 %v1635
  %v1652 = vunpack.c.l.b16 %v1636
  %v1653 = vpack.c.b16 %v1650, %v1649
  %v1654 = vpack.c.b16 %v1652, %v1651
  %v1658 = vsel %vm69, %v1631, 0
  %1660 = vmatprep.subr.bf16.mxu0 0
  %1661 = vmatpush1.bf16.msra.mxu0 0
  %1662 = vmatprep.subr.bf16.mxu0 0
  %1663 = vmatpush1.bf16.msra.mxu0 0
  %1664 = vmatprep.subr.bf16.mxu0 0
  %1665 = vmatpush1.bf16.msra.mxu0 0
  %1666 = vmatprep.subr.bf16.mxu0 0
  %1667 = vmatpush1.bf16.msra.mxu0 0
  %1668 = vmatprep.subr.bf16.mxu0 0
  %1669 = vmatpush1.bf16.msra.mxu0 0
  %1670 = vmatprep.subr.bf16.mxu0 0
  %1671 = vmatpush1.bf16.msra.mxu0 0
  %1672 = vmatprep.subr.bf16.mxu0 0
  %1673 = vmatpush1.bf16.msra.mxu0 %v1654
  %1674 = vmatprep.subr.bf16.mxu0 0
  %1675 = vmatpush1.bf16.msra.mxu0 %v1653
  %1676 = vmatprep.subr.bf16.mxu0 0
  %1677 = vmatpush2.bf16.msra.mxu0 0
  %1678 = vmatprep.subr.bf16.mxu0 0
  %1679 = vmatpush2.bf16.msra.mxu0 0
  %1680 = vmatprep.subr.bf16.mxu0 0
  %1681 = vmatpush2.bf16.msra.mxu0 0
  %1682 = vmatprep.subr.bf16.mxu0 0
  %1683 = vmatpush2.bf16.msra.mxu0 0
  %1684 = vmatprep.subr.bf16.mxu0 0
  %1685 = vmatpush2.bf16.msra.mxu0 0
  %1686 = vmatprep.subr.bf16.mxu0 0
  %1687 = vmatpush2.bf16.msra.mxu0 0
  %1688 = vmatprep.subr.bf16.mxu0 0
  %1689 = vmatpush2.bf16.msra.mxu0 0
  %1690 = vmatprep.subr.bf16.mxu0 0
  %1691 = vmatpush2.bf16.msra.mxu0 0
  %1692 = vmatprep.mubr.bf16.mxu0 0
  %1693 = vmatmul.mubr.bf16.gmra.mxu0 %v1658
  %v1694 = vpop.f32.mrf.mxu0
  %v1695 = vadd.f32 %v1643, %v1694
  %v1696 = vpop.f32.mrf.mxu0
  %v1697 = vpop.f32.mrf.mxu0
  %v1698 = vadd.f32 %v1643, %v1697
  %v1699 = vpop.f32.mrf.mxu0
  %1700 = vdwg.mxu0
  %v1701 = vmul.f32 %v1695, %v1695
  %v1702 = vmul.f32 %v1698, %v1698
  %v1703 = vmul.f32 %v1695, %v1701
  %v1704 = vmul.f32 %v1698, %v1702
  %v1705 = vmul.f32 %v1703, 0.044715
  %v1706 = vmul.f32 %v1704, 0.044715
  %v1707 = vadd.f32 %v1695, %v1705
  %v1708 = vadd.f32 %v1698, %v1706
  %v1709 = vmul.f32 %v1707, 0.7978846
  %v1710 = vmul.f32 %v1708, 0.7978846
  %v1711 = vtanh.pop %v1709
  %v1712 = vtanh.pop %v1710
  %v1713 = vadd.f32 %v1711, 1.0
  %v1714 = vadd.f32 %v1712, 1.0
  %v1715 = vmul.f32 %v1713, 0.5
  %v1716 = vmul.f32 %v1714, 0.5
  %v1717 = vmul.f32 %v1695, %v1715
  %v1718 = vmul.f32 %v1698, %v1716
  %v1719 = vpack.c.bf16 %v1718, %v1717
  %s1720 = scalar_lea.vmem %s12, 32
  %v1721 = vld [vmem:[%s1720] sm:$0xf]
  %v1722 = vld [vmem:[%s1720 + $0x4] sm:$0xf]
  %v1723 = vld [vmem:[%s1720 + $0x8] sm:$0xf]
  %v1724 = vld [vmem:[%s1720 + $0xc] sm:$0xf]
  %v1725 = vld [vmem:[%s1720 + $0x10] sm:$0xf]
  %v1726 = vld [vmem:[%s1720 + $0x14] sm:$0xf]
  %v1727 = vld [vmem:[%s1720 + $0x18] sm:$0xf]
  %v1728 = vld [vmem:[%s1720 + $0x1c] sm:$0xf]
  %s1729 = scalar_lea.vmem %s13, 1
  %v1730 = vld [vmem:[%s1729] sm:$0x1]
  %v1732 = vlaneseq
  %v1733 = vshrl.u32 %v1732, 7
  %v1734 = vsub.s32 0, %v1733
  %v1735 = vrot.slane %v1730, %v1734
  %v1745 = vunpack.c.l.b16 %v1721
  %v1746 = vunpack.c.l.b16 %v1722
  %v1747 = vunpack.c.l.b16 %v1723
  %v1748 = vunpack.c.l.b16 %v1724
  %v1749 = vunpack.c.l.b16 %v1725
  %v1750 = vunpack.c.l.b16 %v1726
  %v1751 = vunpack.c.l.b16 %v1727
  %v1752 = vunpack.c.l.b16 %v1728
  %v1753 = vpack.c.b16 %v1746, %v1745
  %v1754 = vpack.c.b16 %v1748, %v1747
  %v1755 = vpack.c.b16 %v1750, %v1749
  %v1756 = vpack.c.b16 %v1752, %v1751
  %v1762 = vsel %vm894, %v1719, 0
  %1764 = vmatprep.subr.bf16.mxu0 0
  %1765 = vmatpush1.bf16.msra.mxu0 0
  %1766 = vmatprep.subr.bf16.mxu0 0
  %1767 = vmatpush1.bf16.msra.mxu0 0
  %1768 = vmatprep.subr.bf16.mxu0 0
  %1769 = vmatpush1.bf16.msra.mxu0 0
  %1770 = vmatprep.subr.bf16.mxu0 0
  %1771 = vmatpush1.bf16.msra.mxu0 0
  %1772 = vmatprep.subr.bf16.mxu0 0
  %1773 = vmatpush1.bf16.msra.mxu0 %v1756
  %1774 = vmatprep.subr.bf16.mxu0 0
  %1775 = vmatpush1.bf16.msra.mxu0 %v1755
  %1776 = vmatprep.subr.bf16.mxu0 0
  %1777 = vmatpush1.bf16.msra.mxu0 %v1754
  %1778 = vmatprep.subr.bf16.mxu0 0
  %1779 = vmatpush1.bf16.msra.mxu0 %v1753
  %1780 = vmatprep.subr.bf16.mxu0 0
  %1781 = vmatpush2.bf16.msra.mxu0 0
  %1782 = vmatprep.subr.bf16.mxu0 0
  %1783 = vmatpush2.bf16.msra.mxu0 0
  %1784 = vmatprep.subr.bf16.mxu0 0
  %1785 = vmatpush2.bf16.msra.mxu0 0
  %1786 = vmatprep.subr.bf16.mxu0 0
  %1787 = vmatpush2.bf16.msra.mxu0 0
  %1788 = vmatprep.subr.bf16.mxu0 0
  %1789 = vmatpush2.bf16.msra.mxu0 0
  %1790 = vmatprep.subr.bf16.mxu0 0
  %1791 = vmatpush2.bf16.msra.mxu0 0
  %1792 = vmatprep.subr.bf16.mxu0 0
  %1793 = vmatpush2.bf16.msra.mxu0 0
  %1794 = vmatprep.subr.bf16.mxu0 0
  %1795 = vmatpush2.bf16.msra.mxu0 0
  %1796 = vmatprep.mubr.bf16.mxu0 0
  %1797 = vmatmul.mubr.bf16.gmra.mxu0 %v1762
  %v1798 = vpop.f32.mrf.mxu0
  %v1799 = vadd.f32 %v1735, %v1798
  %v1800 = vpop.f32.mrf.mxu0
  %v1801 = vpop.f32.mrf.mxu0
  %v1802 = vadd.f32 %v1735, %v1801
  %v1803 = vpop.f32.mrf.mxu0
  %1804 = vdwg.mxu0
  %v1805 = vadd.f32 %v1629, %v1799
  %v1806 = vadd.f32 %v1630, %v1802
  %s1807 = scalar_lea.vmem %s14, 1
  %v1808 = vld [vmem:[%s1807] sm:$0x1]
  %s1809 = scalar_lea.vmem %s15, 1
  %v1810 = vld [vmem:[%s1809] sm:$0x1]
  %v1811 = vsel %vm69, %v1805, 0.0
  %1812 = vadd.xlane.f32.xlu0 %v1811
  %v1813 = vpop.xlane.xlu0 %1812
  %v1814 = vsel %vm69, %v1806, 0.0
  %1815 = vadd.xlane.f32.xlu0 %v1814
  %v1816 = vpop.xlane.xlu0 %1815
  %v1817 = vmul.f32 %v1813, %v76
  %v1818 = vmul.f32 %v1816, %v76
  %v1819 = vsub.f32 %v1805, %v1817
  %v1820 = vsub.f32 %v1806, %v1818
  %v1821 = vmul.f32 %v1819, %v1819
  %v1822 = vmul.f32 %v1820, %v1820
  %v1823 = vsel %vm69, %v1821, 0.0
  %1824 = vadd.xlane.f32.xlu0 %v1823
  %v1825 = vpop.xlane.xlu0 %1824
  %v1826 = vsel %vm69, %v1822, 0.0
  %1827 = vadd.xlane.f32.xlu0 %v1826
  %v1828 = vpop.xlane.xlu0 %1827
  %v1829 = vmul.f32 %v1825, %v76
  %v1830 = vmul.f32 %v1828, %v76
  %v1831 = vadd.f32 %v1829, 1e-12
  %v1832 = vadd.f32 %v1830, 1e-12
  %v1833 = vrsqrt.pop %v1831
  %v1834 = vrsqrt.pop %v1832
  %v1835 = vmul.f32 %v1819, %v1833
  %v1836 = vmul.f32 %v1820, %v1834
  %v1838 = vlaneseq
  %v1839 = vshrl.u32 %v1838, 7
  %v1840 = vsub.s32 0, %v1839
  %v1841 = vrot.slane %v1808, %v1840
  %v1843 = vmul.f32 %v1835, %v1841
  %v1844 = vmul.f32 %v1836, %v1841
  %v1846 = vlaneseq
  %v1847 = vshrl.u32 %v1846, 7
  %v1848 = vsub.s32 0, %v1847
  %v1849 = vrot.slane %v1810, %v1848
  %v1851 = vadd.f32 %v1843, %v1849
  %v1852 = vadd.f32 %v1844, %v1849
  %v1853 = vld [vmem:[%s16] sm:$0xff]
  %v1854 = vld [vmem:[%s16 + $0x8] sm:$0xff]
  %v1855 = vld [vmem:[%s16 + $0x10] sm:$0xff]
  %v1856 = vld [vmem:[%s16 + $0x18] sm:$0xff]
  %v1857 = vld [vmem:[%s17] sm:$0x1]
  %v1859 = vlaneseq
  %v1860 = vshrl.u32 %v1859, 7
  %v1861 = vsub.s32 0, %v1860
  %v1862 = vrot.slane %v1857, %v1861
  %v1866 = vrot.slane %v1852, 7
  %vm1867 = vcmask 1041409
  %v1868 = vsel %vm1867, %v1866, %v1851
  %v1869 = vsel %vm69, %v1868, 0
  %1871 = vmatprep.subr.mxu0 0.0
  %1872 = vmatpush1.msra.mxu0 0.0
  %1873 = vmatprep.subr.mxu0 0.0
  %1874 = vmatpush1.msra.mxu0 0.0
  %1875 = vmatprep.subr.mxu0 0.0
  %1876 = vmatpush1.msra.mxu0 0.0
  %1877 = vmatprep.subr.mxu0 0.0
  %1878 = vmatpush1.msra.mxu0 0.0
  %1879 = vmatprep.subr.mxu0 0.0
  %1880 = vmatpush1.msra.mxu0 0.0
  %1881 = vmatprep.subr.mxu0 0.0
  %1882 = vmatpush1.msra.mxu0 0.0
  %1883 = vmatprep.subr.mxu0 0.0
  %1884 = vmatpush1.msra.mxu0 0.0
  %1885 = vmatprep.subr.mxu0 0.0
  %1886 = vmatpush1.msra.mxu0 0.0
  %1887 = vmatprep.subr.mxu0 0.0
  %1888 = vmatpush1.msra.mxu0 0.0
  %1889 = vmatprep.subr.mxu0 0.0
  %1890 = vmatpush1.msra.mxu0 0.0
  %1891 = vmatprep.subr.mxu0 0.0
  %1892 = vmatpush1.msra.mxu0 0.0
  %1893 = vmatprep.subr.mxu0 0.0
  %1894 = vmatpush1.msra.mxu0 0.0
  %1895 = vmatprep.subr.mxu0 0.0
  %1896 = vmatpush1.msra.mxu0 %v1856
  %1897 = vmatprep.subr.mxu0 0.0
  %1898 = vmatpush1.msra.mxu0 %v1855
  %1899 = vmatprep.subr.mxu0 0.0
  %1900 = vmatpush1.msra.mxu0 %v1854
  %1901 = vmatprep.subr.mxu0 0.0
  %1902 = vmatpush1.msra.mxu0 %v1853
  %1903 = vmatprep.subr.mxu0 0.0
  %1904 = vmatpush2.msra.mxu0 0.0
  %1905 = vmatprep.subr.mxu0 0.0
  %1906 = vmatpush2.msra.mxu0 0.0
  %1907 = vmatprep.subr.mxu0 0.0
  %1908 = vmatpush2.msra.mxu0 0.0
  %1909 = vmatprep.subr.mxu0 0.0
  %1910 = vmatpush2.msra.mxu0 0.0
  %1911 = vmatprep.subr.mxu0 0.0
  %1912 = vmatpush2.msra.mxu0 0.0
  %1913 = vmatprep.subr.mxu0 0.0
  %1914 = vmatpush2.msra.mxu0 0.0
  %1915 = vmatprep.subr.mxu0 0.0
  %1916 = vmatpush2.msra.mxu0 0.0
  %1917 = vmatprep.subr.mxu0 0.0
  %1918 = vmatpush2.msra.mxu0 0.0
  %1919 = vmatprep.subr.mxu0 0.0
  %1920 = vmatpush2.msra.mxu0 0.0
  %1921 = vmatprep.subr.mxu0 0.0
  %1922 = vmatpush2.msra.mxu0 0.0
  %1923 = vmatprep.subr.mxu0 0.0
  %1924 = vmatpush2.msra.mxu0 0.0
  %1925 = vmatprep.subr.mxu0 0.0
  %1926 = vmatpush2.msra.mxu0 0.0
  %1927 = vmatprep.subr.mxu0 0.0
  %1928 = vmatpush2.msra.mxu0 0.0
  %1929 = vmatprep.subr.mxu0 0.0
  %1930 = vmatpush2.msra.mxu0 0.0
  %1931 = vmatprep.subr.mxu0 0.0
  %1932 = vmatpush2.msra.mxu0 0.0
  %1933 = vmatprep.subr.mxu0 0.0
  %1934 = vmatpush2.msra.mxu0 0.0
  %1935 = vmatprep.mubr.f32.mxu0 0.0
  %1936 = vmatmul.mubr.f32.gmra.mxu0 %v1869
  %v1937 = vpop.f32.mrf.mxu0
  %v1938 = vadd.f32 %v1862, %v1937
  %v1939 = vpop.f32.mrf.mxu0
  %1940 = vdwg.mxu0
  %vm1941 = vcmask 17408
  %v1942 = vsel %vm1941, %v1938, -inf
  %1943 = vmax.xlane.f32.xlu0 %v1942
  %v1944 = vpop.xlane.xlu0 %1943
  %v1945 = vsub.f32 %v1938, %v1944
  %v1946 = vmul.f32 %v1945, 1.442695
  %v1947 = vpow.pop %v1946
  %v1948 = vsel %vm1941, %v1947, 0.0
  %1949 = vadd.xlane.f32.xlu0 %v1948
  %v1950 = vpop.xlane.xlu0 %1949
  %v1951 = vlog2.pop %v1950
  %v1952 = vmul.f32 %v1951, 0.6931472
  %v1953 = vadd.f32 %v1944, %v1952
  %v1954 = vsub.f32 %v1938, %v1953
  %v1955 = vld [vmem:[%s18] sm:$0x3]
  %v1956 = vmul.f32 %v1955, %v1954
  %v1957 = vsel %vm1941, %v1956, 0.0
  %1958 = vadd.xlane.f32.xlu0 %v1957
  %v1959 = vpop.xlane.xlu0 %1958
  %v1960 = vsub.f32 0.0, %v1959
  %vm1961 = vcmask 23552
  %v1962 = vsel %vm1961, %v1938, %v1960
  %vm1963 = vcmask 31744
  %v1964 = vsel %vm1963, %v1962, 0.0
  %1965 = vst [vmem:[%s19] sm:$0x3] %v1964
  // Predicated region
  $region78: #{forward.1} parent=0 // pred_check
    _
  $region79: #{forward.1} parent=0 // pred_check_branch
    %1967 = sbr.rel (0) target = $region81
  $region80: #{forward.1} parent=0 // pred_region
    _
  $region81: #{forward.1} parent=0 // pred_fallthru
    _
  // Predicated region
  $region82: #{forward.1} parent=0 // pred_check
    _
  $region83: #{forward.1} parent=0 // pred_check_branch
    %1969 = sbr.rel (0) target = $region85
  $region84: #{forward.1} parent=0 // pred_region
    _
  $region85: #{forward.1} parent=0 // pred_fallthru
    _

</llo_original>
